<compile_context>
chip_gen: v5e
topology: v5e:2x2
jax: 0.10.0
libtpu: 0.0.40
codegen_flags: <defaults>
</compile_context>

<pallas_src>
import jax
import jax.numpy as jnp
from jax.experimental import pallas as pl
from jax.experimental.pallas import tpu as pltpu


def _round_up(x, m):
    return ((x + m - 1) // m) * m


# ----------------------------------------------------------------------------
# Weight prep: fold Conv+BN into a block-Toeplitz bf16 weight over padded slabs
# ----------------------------------------------------------------------------
def _fold_conv_bn(p, W, cin_pad, cout_pad, eps=1e-5):
    """Fold Conv3x3(pad=1)+BN(eval) into a per-kh block-Toeplitz bf16 weight that
    maps a padded lane slab (W+2)*cin_pad -> padded lane slab (W+2)*cout_pad.
    Halo columns and padded channels of the output get exactly zero weight and
    zero shift (so ReLU keeps them zero), plus an f32 shift row."""
    weight = p["weight"]                                   # (Cout, Cin, 3, 3) OIHW
    Cout, Cin = weight.shape[0], weight.shape[1]
    assert Cin <= cin_pad and Cout <= cout_pad
    w_hwio = jnp.transpose(weight, (2, 3, 1, 0)).astype(jnp.float32)   # (3,3,Cin,Cout)

    inv_std = 1.0 / jnp.sqrt(p["running_var"] + eps)
    scale = p["gamma"] * inv_std
    shift = p["beta"] - p["running_mean"] * scale + p["conv_bias"] * scale
    w_scaled = w_hwio * scale[None, None, None, :]         # BN scale folded into W

    # Zero-pad the channel dims (padded input channels are zero in the slab;
    # padded output channels must come out exactly zero).
    w_pad = jnp.pad(w_scaled,
                    ((0, 0), (0, 0), (0, cin_pad - Cin), (0, cout_pad - Cout)))

    Wp = W + 2
    # Real output column w reads padded input column wi = w + kw, kw in 0..2.
    wi = jnp.arange(W)[:, None] + jnp.arange(3)[None, :]                         # (W,3)
    onehot = (wi[..., None] == jnp.arange(Wp)[None, None, :]).astype(jnp.float32)  # (W,3,Wp)
    wb = jnp.einsum("wkp,hkcf->hpcwf", onehot, w_pad)      # (3, Wp, cin_pad, W, cout_pad)

    # Place the interior output columns at padded positions 1..W; halo output
    # columns 0 and W+1 keep zero weight.
    w_full = jnp.zeros((3, Wp, cin_pad, Wp, cout_pad), jnp.float32)
    w_full = w_full.at[:, :, :, 1:W + 1, :].set(wb)
    w_big = w_full.reshape(3, Wp * cin_pad, Wp * cout_pad).astype(jnp.bfloat16)

    shift_full = jnp.zeros((Wp, cout_pad), jnp.float32)
    shift_full = shift_full.at[1:W + 1, :Cout].set(jnp.broadcast_to(shift, (W, Cout)))
    shift_row = shift_full.reshape(1, Wp * cout_pad)
    return w_big, shift_row


# ----------------------------------------------------------------------------
# In-kernel helpers
# ----------------------------------------------------------------------------
def _conv_unit(x_slab, w_ref, shift_ref, H):
    """One fused Conv3x3(pad=1)+BN+ReLU on a padded bf16 lane-slab value.
    Returns the f32 interior rows (bn, H, Kout).  Halo columns and padded
    channels are exactly zero because the folded weight & shift are zero there."""
    bn = x_slab.shape[0]
    kin = x_slab.shape[2]
    kout = w_ref.shape[2]
    acc = jnp.zeros((bn * H, kout), dtype=jnp.float32)
    for kh in range(3):                       # 3 consolidated MXU pushes, f32 accumulate
        rows = x_slab[:, kh:kh + H, :].reshape(bn * H, kin)
        acc = acc + jnp.dot(rows, w_ref[kh], preferred_element_type=jnp.float32)
    y = jnp.maximum(acc + shift_ref[...], 0.0)             # folded BN shift + ReLU
    return y.reshape(bn, H, kout)


def _repad_rows(interior_f32, dtype):
    """Re-attach the two zero halo rows (the lane halo is already zero)."""
    bn, _, k = interior_f32.shape
    zrow = jnp.zeros((bn, 1, k), jnp.float32)
    return jnp.concatenate([zrow, interior_f32, zrow], axis=1).astype(dtype)


def _make_step_kernel(n_extra, H):
    """Fused fractal step: mean( conv_b(conv_a(z)), conv_1(z), ..., conv_n(z) )."""
    def step_kernel(z_ref, wa_ref, sa_ref, wb_ref, sb_ref, *rest):
        o_ref = rest[-1]
        extra = rest[:-1]                      # (w1, s1, ..., w_ne, s_ne)
        z = z_ref[...]                         # bf16 padded slab, loaded once
        # Column 0: two chained conv units; intermediate stays on-chip (no HBM).
        a = _conv_unit(z, wa_ref, sa_ref, H)
        b = _conv_unit(_repad_rows(a, jnp.bfloat16), wb_ref, sb_ref, H)
        acc = b
        for e in range(n_extra):               # columns 1 .. join_x_index-1
            acc = acc + _conv_unit(z, extra[2 * e], extra[2 * e + 1], H)
        joined = acc * (1.0 / float(1 + n_extra))   # join(): stack + mean(dim=0)
        o_ref[...] = _repad_rows(joined, o_ref.dtype)   # write pre-padded bf16 slab
    return step_kernel


# ----------------------------------------------------------------------------
# One fractal iteration = one pallas_call
# ----------------------------------------------------------------------------
def fractal_step(slab, layer_a, layer_b, extra_layers, W, batch_block=None):
    """Input/output are pre-padded bf16 lane slabs (N, H+2, (W+2)*C_pad)."""
    N, Hp, kin = slab.shape
    H = Hp - 2
    cin_pad = kin // (W + 2)
    planes = layer_a["weight"].shape[0]
    cout_pad = _round_up(planes, 8)
    kout = (W + 2) * cout_pad

    wa, sa = _fold_conv_bn(layer_a, W, cin_pad, cout_pad)
    wb, sb = _fold_conv_bn(layer_b, W, cout_pad, cout_pad)
    extras = [_fold_conv_bn(p, W, cin_pad, cout_pad) for p in extra_layers]

    bn = N if batch_block is None else batch_block
    assert N % bn == 0, "batch_block must divide the batch"

    def weight_spec(k_in):
        return pl.BlockSpec((3, k_in, kout), lambda b: (0, 0, 0))
    shift_spec = pl.BlockSpec((1, kout), lambda b: (0, 0))

    in_specs = [pl.BlockSpec((bn, Hp, kin), lambda b: (b, 0, 0)),
                weight_spec(kin), shift_spec,
                weight_spec(kout), shift_spec]
    args = [slab, wa, sa, wb, sb]
    for (we, se) in extras:
        in_specs += [weight_spec(kin), shift_spec]
        args += [we, se]

    # Advisory cost estimate so XLA schedules surrounding glue around the call.
    conv_kins = [kin, kout] + [kin] * len(extras)
    flops = sum(2 * 3 * N * H * k * kout for k in conv_kins)
    bytes_accessed = (N * Hp * kin * 2 + N * Hp * kout * 2
                      + sum(3 * k * kout * 2 + kout * 4 for k in conv_kins))

    out = pl.pallas_call(
        _make_step_kernel(len(extras), H),
        out_shape=jax.ShapeDtypeStruct((N, Hp, kout), jnp.bfloat16),
        grid_spec=pltpu.PrefetchScalarGridSpec(
            num_scalar_prefetch=0,
            grid=(N // bn,),               # default: one grid step for the whole batch
            in_specs=in_specs,
            out_specs=pl.BlockSpec((bn, Hp, kout), lambda b: (b, 0, 0)),
        ),
        compiler_params=pltpu.CompilerParams(
            dimension_semantics=("parallel",)),
        cost_estimate=pl.CostEstimate(flops=flops, transcendentals=0,
                                      bytes_accessed=bytes_accessed),
    )(*args)
    return out


# ----------------------------------------------------------------------------
# Block boundary glue: NCHW <-> padded bf16 lane slabs, final 2x2 max-pool
# ----------------------------------------------------------------------------
def nchw_to_slab(x_nchw, c_pad):
    N, C, H, W = x_nchw.shape
    x = jnp.transpose(x_nchw, (0, 2, 3, 1))                       # NHWC once
    x = jnp.pad(x, ((0, 0), (1, 1), (1, 1), (0, c_pad - C)))      # single entry pad
    return x.reshape(N, H + 2, (W + 2) * c_pad).astype(jnp.bfloat16)


def slab_to_nchw_pool(slab, W, cout):
    # TODO(synk): the 2x2 max-pool (and the mean-join inside the step kernel's
    #             epilogue) are trivially memory-bound glue; the pool stays jnp.
    N, Hp, k = slab.shape
    H = Hp - 2
    c_pad = k // (W + 2)
    y = slab.reshape(N, Hp, W + 2, c_pad)[:, 1:H + 1, 1:W + 1, :cout]
    y = y.astype(jnp.float32)
    pooled = y.reshape(N, H // 2, 2, W // 2, 2, cout).max(axis=(2, 4))  # MaxPool2d(2,2)
    return jnp.transpose(pooled, (0, 3, 1, 2))                    # back to NCHW


# ----------------------------------------------------------------------------
# Block forward (faithful transcription of FratalNet.Block.forward)
# ----------------------------------------------------------------------------
def _make_join_index(c):
    index = [2, 3]
    for _ in range(c - 3):
        index = index + index
        index[-1] += 1
    return index


def block_forward(x_nchw, params, c, batch_block=None):
    N, Cin, H, W = x_nchw.shape
    planes = params[0][0]["weight"].shape[0]
    max_col = c
    max_dep = 2 ** (c - 1)
    join_index = _make_join_index(c)

    num_col = [0 for _ in range(max_col - 1)]
    index = 0   # NOTE: never advanced in the original forward(); kept as written.

    cat_slab = nchw_to_slab(x_nchw, _round_up(Cin, 8))
    out_c = Cin
    for i in range(max_dep // 2):
        join_x_index = join_index[index]
        layer_a = params[0][i * 2]           # column 0, first conv of the pair
        layer_b = params[0][i * 2 + 1]       # column 0, second conv of the pair
        extra = [params[j][num_col[j - 1]] for j in range(1, join_x_index)]
        cat_slab = fractal_step(cat_slab, layer_a, layer_b, extra, W,
                                batch_block=batch_block)
        for l in range(join_x_index):
            if l != 0:
                num_col[l - 1] += 1
        out_c = planes
    return slab_to_nchw_pool(cat_slab, W, out_c)


# ----------------------------------------------------------------------------
# Pure-JAX f32 reference (mirrors the PyTorch module exactly)
# ----------------------------------------------------------------------------
def _ref_conv_bn_relu(x_nhwc, p, eps=1e-5):
    w_hwio = jnp.transpose(p["weight"], (2, 3, 1, 0))
    y = jax.lax.conv_general_dilated(
        x_nhwc, w_hwio, window_strides=(1, 1), padding=((1, 1), (1, 1)),
        dimension_numbers=("NHWC", "HWIO", "NHWC"),
        precision=jax.lax.Precision.HIGHEST)
    y = y + p["conv_bias"][None, None, None, :]
    y = (y - p["running_mean"]) / jnp.sqrt(p["running_var"] + eps) * p["gamma"] + p["beta"]
    return jnp.maximum(y, 0.0)


def ref_block_forward(x_nchw, params, c):
    max_col = c
    max_dep = 2 ** (c - 1)
    join_index = _make_join_index(c)
    x = jnp.transpose(x_nchw, (0, 2, 3, 1))
    in_x = [x for _ in range(max_col)]
    num_col = [0 for _ in range(max_col - 1)]
    index = 0
    cat_x = x
    for i in range(max_dep // 2):
        join_x_index = join_index[index]
        for j in range(join_x_index):
            if j == 0:
                in_x[0] = _ref_conv_bn_relu(
                    _ref_conv_bn_relu(in_x[0], params[0][i * 2]), params[0][i * 2 + 1])
            else:
                in_x[j] = _ref_conv_bn_relu(in_x[j], params[j][num_col[j - 1]])
        cat_x = sum(in_x[:join_x_index]) / float(join_x_index)
        for l in range(join_x_index):
            in_x[l] = cat_x
            if l != 0:
                num_col[l - 1] += 1
    N, H, W, C = cat_x.shape
    pooled = cat_x.reshape(N, H // 2, 2, W // 2, 2, C).max(axis=(2, 4))
    return jnp.transpose(pooled, (0, 3, 1, 2))


# ----------------------------------------------------------------------------
# Parameter construction (mirrors Block._make_layer with f = Conv-BN-ReLU)
# ----------------------------------------------------------------------------
def init_conv_unit_params(key, cin, cout):
    ks = jax.random.split(key, 6)
    return dict(
        weight=0.1 * jax.random.normal(ks[0], (cout, cin, 3, 3), jnp.float32),
        conv_bias=0.1 * jax.random.normal(ks[1], (cout,), jnp.float32),
        gamma=1.0 + 0.1 * jax.random.normal(ks[2], (cout,), jnp.float32),
        beta=0.1 * jax.random.normal(ks[3], (cout,), jnp.float32),
        running_mean=0.1 * jax.random.normal(ks[4], (cout,), jnp.float32),
        running_var=jnp.abs(1.0 + 0.1 * jax.random.normal(ks[5], (cout,), jnp.float32)),
    )


def init_block_params(key, inplanes, planes, c):
    per_col = [2 ** (-i - 1) for i in range(-c, 0)]     # layers per column
    params = []
    for n_layers in per_col:
        col = []
        for p in range(n_layers):
            key, sub = jax.random.split(key)
            cin = inplanes if p == 0 else planes
            col.append(init_conv_unit_params(sub, cin, planes))
        params.append(col)
    return params


if __name__ == "__main__":
    key = jax.random.PRNGKey(0)
    N, inplanes, planes, H, W, c = 2, 4, 8, 16, 16, 3

    kx, kp = jax.random.split(key)
    x = jax.random.normal(kx, (N, inplanes, H, W), dtype=jnp.float32)
    params = init_block_params(kp, inplanes, planes, c)

    # --- check 1: one fused fractal step (double conv + single conv + mean join)
    slab0 = nchw_to_slab(x, _round_up(inplanes, 8))
    step_out = jax.block_until_ready(
        fractal_step(slab0, params[0][0], params[0][1], [params[1][0]], W))
    x_nhwc = jnp.transpose(x, (0, 2, 3, 1))
    ref_a = _ref_conv_bn_relu(_ref_conv_bn_relu(x_nhwc, params[0][0]), params[0][1])
    ref_c = _ref_conv_bn_relu(x_nhwc, params[1][0])
    ref_step = 0.5 * (ref_a + ref_c)
    got_step = step_out.reshape(N, H + 2, W + 2, -1)[:, 1:H + 1, 1:W + 1, :planes]
    got_step = got_step.astype(jnp.float32)
    err_s = jnp.max(jnp.abs(got_step - ref_step))
    # bf16 activations/weights with f32 accumulation -> loosened tolerance.
    assert jnp.allclose(got_step, ref_step, atol=3e-2, rtol=3e-2), f"step max err {err_s}"

    # --- check 2: full fractal Block forward ---------------------------------
    blk = jax.jit(lambda xx: block_forward(xx, params, c))
    out_blk = jax.block_until_ready(blk(x))
    ref_blk = ref_block_forward(x, params, c)
    assert out_blk.shape == (N, planes, H // 2, W // 2)
    err_b = jnp.max(jnp.abs(out_blk - ref_blk))
    assert jnp.allclose(out_blk, ref_blk, atol=5e-2, rtol=5e-2), f"block max err {err_b}"

    print("KERNEL_OK")
</pallas_src>

<mosaic_0001>
module attributes {stable_mosaic.version = 11 : i64} {
  func.func @step_kernel(%arg0: i32, %arg1: memref<2x18x144xbf16, #tpu.memory_space<vmem>>, %arg2: memref<3x144x144xbf16, #tpu.memory_space<vmem>>, %arg3: memref<1x144xf32, #tpu.memory_space<vmem>>, %arg4: memref<3x144x144xbf16, #tpu.memory_space<vmem>>, %arg5: memref<1x144xf32, #tpu.memory_space<vmem>>, %arg6: memref<3x144x144xbf16, #tpu.memory_space<vmem>>, %arg7: memref<1x144xf32, #tpu.memory_space<vmem>>, %arg8: memref<2x18x144xbf16, #tpu.memory_space<vmem>>) attributes {dimension_semantics = [#tpu.dimension_semantics<parallel>], iteration_bounds = array<i64: 1>, scalar_prefetch = 0 : i64, scratch_operands = 0 : i64, tpu.core_type = #tpu.core_type<tc>, window_params = [{transform_indices = @transform_0, window_bounds = array<i64: 2, 18, 144>}, {pipeline_mode = #tpu.pipeline_mode<synchronous>, transform_indices = @transform_1, window_bounds = array<i64: 3, 144, 144>}, {pipeline_mode = #tpu.pipeline_mode<synchronous>, transform_indices = @transform_2, window_bounds = array<i64: 1, 144>}, {pipeline_mode = #tpu.pipeline_mode<synchronous>, transform_indices = @transform_3, window_bounds = array<i64: 3, 144, 144>}, {pipeline_mode = #tpu.pipeline_mode<synchronous>, transform_indices = @transform_4, window_bounds = array<i64: 1, 144>}, {pipeline_mode = #tpu.pipeline_mode<synchronous>, transform_indices = @transform_5, window_bounds = array<i64: 3, 144, 144>}, {pipeline_mode = #tpu.pipeline_mode<synchronous>, transform_indices = @transform_6, window_bounds = array<i64: 1, 144>}, {transform_indices = @transform_7, window_bounds = array<i64: 2, 18, 144>}]} {
    %c0 = arith.constant 0 : index
    %c0_0 = arith.constant 0 : index
    %c0_1 = arith.constant 0 : index
    %0 = vector.load %arg1[%c0, %c0_0, %c0_1] : memref<2x18x144xbf16, #tpu.memory_space<vmem>>, vector<2x18x144xbf16>
    %cst = arith.constant 0.000000e+00 : f32
    %1 = vector.broadcast %cst : f32 to vector<32x144xf32>
    %2 = vector.extract_strided_slice %0 {offsets = [0, 0, 0], sizes = [2, 16, 144], strides = [1, 1, 1]} : vector<2x18x144xbf16> to vector<2x16x144xbf16>
    %3 = vector.shape_cast %2 : vector<2x16x144xbf16> to vector<32x144xbf16>
    %c0_2 = arith.constant 0 : index
    %c0_3 = arith.constant 0 : index
    %c0_4 = arith.constant 0 : index
    %4 = vector.load %arg2[%c0_2, %c0_3, %c0_4] : memref<3x144x144xbf16, #tpu.memory_space<vmem>>, vector<1x144x144xbf16>
    %5 = vector.shape_cast %4 : vector<1x144x144xbf16> to vector<144x144xbf16>
    %cst_5 = arith.constant dense<0.000000e+00> : vector<32x144xf32>
    %6 = tpu.matmul %3, %5, %cst_5 {dimension_numbers = #tpu.dot_dimension_numbers<[1], [0], [0], [1], [0, 0, 1, 1], [], []>} : vector<32x144xbf16>, vector<144x144xbf16>, vector<32x144xf32> -> vector<32x144xf32>
    %7 = arith.addf %1, %6 : vector<32x144xf32>
    %8 = vector.extract_strided_slice %0 {offsets = [0, 1, 0], sizes = [2, 16, 144], strides = [1, 1, 1]} : vector<2x18x144xbf16> to vector<2x16x144xbf16>
    %9 = vector.shape_cast %8 : vector<2x16x144xbf16> to vector<32x144xbf16>
    %c1 = arith.constant 1 : index
    %c0_6 = arith.constant 0 : index
    %c0_7 = arith.constant 0 : index
    %10 = vector.load %arg2[%c1, %c0_6, %c0_7] : memref<3x144x144xbf16, #tpu.memory_space<vmem>>, vector<1x144x144xbf16>
    %11 = vector.shape_cast %10 : vector<1x144x144xbf16> to vector<144x144xbf16>
    %cst_8 = arith.constant dense<0.000000e+00> : vector<32x144xf32>
    %12 = tpu.matmul %9, %11, %cst_8 {dimension_numbers = #tpu.dot_dimension_numbers<[1], [0], [0], [1], [0, 0, 1, 1], [], []>} : vector<32x144xbf16>, vector<144x144xbf16>, vector<32x144xf32> -> vector<32x144xf32>
    %13 = arith.addf %7, %12 : vector<32x144xf32>
    %14 = vector.extract_strided_slice %0 {offsets = [0, 2, 0], sizes = [2, 16, 144], strides = [1, 1, 1]} : vector<2x18x144xbf16> to vector<2x16x144xbf16>
    %15 = vector.shape_cast %14 : vector<2x16x144xbf16> to vector<32x144xbf16>
    %c2 = arith.constant 2 : index
    %c0_9 = arith.constant 0 : index
    %c0_10 = arith.constant 0 : index
    %16 = vector.load %arg2[%c2, %c0_9, %c0_10] : memref<3x144x144xbf16, #tpu.memory_space<vmem>>, vector<1x144x144xbf16>
    %17 = vector.shape_cast %16 : vector<1x144x144xbf16> to vector<144x144xbf16>
    %cst_11 = arith.constant dense<0.000000e+00> : vector<32x144xf32>
    %18 = tpu.matmul %15, %17, %cst_11 {dimension_numbers = #tpu.dot_dimension_numbers<[1], [0], [0], [1], [0, 0, 1, 1], [], []>} : vector<32x144xbf16>, vector<144x144xbf16>, vector<32x144xf32> -> vector<32x144xf32>
    %19 = arith.addf %13, %18 : vector<32x144xf32>
    %c0_12 = arith.constant 0 : index
    %c0_13 = arith.constant 0 : index
    %20 = vector.load %arg3[%c0_12, %c0_13] : memref<1x144xf32, #tpu.memory_space<vmem>>, vector<1x144xf32>
    %21 = vector.broadcast %20 : vector<1x144xf32> to vector<32x144xf32>
    %22 = arith.addf %19, %21 : vector<32x144xf32>
    %cst_14 = arith.constant 0.000000e+00 : f32
    %23 = vector.broadcast %cst_14 : f32 to vector<32x144xf32>
    %24 = arith.maximumf %22, %23 : vector<32x144xf32>
    %25 = vector.shape_cast %24 : vector<32x144xf32> to vector<2x16x144xf32>
    %cst_15 = arith.constant 0.000000e+00 : f32
    %26 = vector.broadcast %cst_15 : f32 to vector<2x1x144xf32>
    %27 = tpu.concatenate %26, %25, %26 in 1 : vector<2x1x144xf32>, vector<2x16x144xf32>, vector<2x1x144xf32> -> vector<2x18x144xf32>
    %28 = arith.truncf %27 : vector<2x18x144xf32> to vector<2x18x144xbf16>
    %cst_16 = arith.constant 0.000000e+00 : f32
    %29 = vector.broadcast %cst_16 : f32 to vector<32x144xf32>
    %30 = vector.extract_strided_slice %28 {offsets = [0, 0, 0], sizes = [2, 16, 144], strides = [1, 1, 1]} : vector<2x18x144xbf16> to vector<2x16x144xbf16>
    %31 = vector.shape_cast %30 : vector<2x16x144xbf16> to vector<32x144xbf16>
    %c0_17 = arith.constant 0 : index
    %c0_18 = arith.constant 0 : index
    %c0_19 = arith.constant 0 : index
    %32 = vector.load %arg4[%c0_17, %c0_18, %c0_19] : memref<3x144x144xbf16, #tpu.memory_space<vmem>>, vector<1x144x144xbf16>
    %33 = vector.shape_cast %32 : vector<1x144x144xbf16> to vector<144x144xbf16>
    %cst_20 = arith.constant dense<0.000000e+00> : vector<32x144xf32>
    %34 = tpu.matmul %31, %33, %cst_20 {dimension_numbers = #tpu.dot_dimension_numbers<[1], [0], [0], [1], [0, 0, 1, 1], [], []>} : vector<32x144xbf16>, vector<144x144xbf16>, vector<32x144xf32> -> vector<32x144xf32>
    %35 = arith.addf %29, %34 : vector<32x144xf32>
    %36 = vector.extract_strided_slice %28 {offsets = [0, 1, 0], sizes = [2, 16, 144], strides = [1, 1, 1]} : vector<2x18x144xbf16> to vector<2x16x144xbf16>
    %37 = vector.shape_cast %36 : vector<2x16x144xbf16> to vector<32x144xbf16>
    %c1_21 = arith.constant 1 : index
    %c0_22 = arith.constant 0 : index
    %c0_23 = arith.constant 0 : index
    %38 = vector.load %arg4[%c1_21, %c0_22, %c0_23] : memref<3x144x144xbf16, #tpu.memory_space<vmem>>, vector<1x144x144xbf16>
    %39 = vector.shape_cast %38 : vector<1x144x144xbf16> to vector<144x144xbf16>
    %cst_24 = arith.constant dense<0.000000e+00> : vector<32x144xf32>
    %40 = tpu.matmul %37, %39, %cst_24 {dimension_numbers = #tpu.dot_dimension_numbers<[1], [0], [0], [1], [0, 0, 1, 1], [], []>} : vector<32x144xbf16>, vector<144x144xbf16>, vector<32x144xf32> -> vector<32x144xf32>
    %41 = arith.addf %35, %40 : vector<32x144xf32>
    %42 = vector.extract_strided_slice %28 {offsets = [0, 2, 0], sizes = [2, 16, 144], strides = [1, 1, 1]} : vector<2x18x144xbf16> to vector<2x16x144xbf16>
    %43 = vector.shape_cast %42 : vector<2x16x144xbf16> to vector<32x144xbf16>
    %c2_25 = arith.constant 2 : index
    %c0_26 = arith.constant 0 : index
    %c0_27 = arith.constant 0 : index
    %44 = vector.load %arg4[%c2_25, %c0_26, %c0_27] : memref<3x144x144xbf16, #tpu.memory_space<vmem>>, vector<1x144x144xbf16>
    %45 = vector.shape_cast %44 : vector<1x144x144xbf16> to vector<144x144xbf16>
    %cst_28 = arith.constant dense<0.000000e+00> : vector<32x144xf32>
    %46 = tpu.matmul %43, %45, %cst_28 {dimension_numbers = #tpu.dot_dimension_numbers<[1], [0], [0], [1], [0, 0, 1, 1], [], []>} : vector<32x144xbf16>, vector<144x144xbf16>, vector<32x144xf32> -> vector<32x144xf32>
    %47 = arith.addf %41, %46 : vector<32x144xf32>
    %c0_29 = arith.constant 0 : index
    %c0_30 = arith.constant 0 : index
    %48 = vector.load %arg5[%c0_29, %c0_30] : memref<1x144xf32, #tpu.memory_space<vmem>>, vector<1x144xf32>
    %49 = vector.broadcast %48 : vector<1x144xf32> to vector<32x144xf32>
    %50 = arith.addf %47, %49 : vector<32x144xf32>
    %cst_31 = arith.constant 0.000000e+00 : f32
    %51 = vector.broadcast %cst_31 : f32 to vector<32x144xf32>
    %52 = arith.maximumf %50, %51 : vector<32x144xf32>
    %53 = vector.shape_cast %52 : vector<32x144xf32> to vector<2x16x144xf32>
    %cst_32 = arith.constant 0.000000e+00 : f32
    %54 = vector.broadcast %cst_32 : f32 to vector<32x144xf32>
    %55 = vector.extract_strided_slice %0 {offsets = [0, 0, 0], sizes = [2, 16, 144], strides = [1, 1, 1]} : vector<2x18x144xbf16> to vector<2x16x144xbf16>
    %56 = vector.shape_cast %55 : vector<2x16x144xbf16> to vector<32x144xbf16>
    %c0_33 = arith.constant 0 : index
    %c0_34 = arith.constant 0 : index
    %c0_35 = arith.constant 0 : index
    %57 = vector.load %arg6[%c0_33, %c0_34, %c0_35] : memref<3x144x144xbf16, #tpu.memory_space<vmem>>, vector<1x144x144xbf16>
    %58 = vector.shape_cast %57 : vector<1x144x144xbf16> to vector<144x144xbf16>
    %cst_36 = arith.constant dense<0.000000e+00> : vector<32x144xf32>
    %59 = tpu.matmul %56, %58, %cst_36 {dimension_numbers = #tpu.dot_dimension_numbers<[1], [0], [0], [1], [0, 0, 1, 1], [], []>} : vector<32x144xbf16>, vector<144x144xbf16>, vector<32x144xf32> -> vector<32x144xf32>
    %60 = arith.addf %54, %59 : vector<32x144xf32>
    %61 = vector.extract_strided_slice %0 {offsets = [0, 1, 0], sizes = [2, 16, 144], strides = [1, 1, 1]} : vector<2x18x144xbf16> to vector<2x16x144xbf16>
    %62 = vector.shape_cast %61 : vector<2x16x144xbf16> to vector<32x144xbf16>
    %c1_37 = arith.constant 1 : index
    %c0_38 = arith.constant 0 : index
    %c0_39 = arith.constant 0 : index
    %63 = vector.load %arg6[%c1_37, %c0_38, %c0_39] : memref<3x144x144xbf16, #tpu.memory_space<vmem>>, vector<1x144x144xbf16>
    %64 = vector.shape_cast %63 : vector<1x144x144xbf16> to vector<144x144xbf16>
    %cst_40 = arith.constant dense<0.000000e+00> : vector<32x144xf32>
    %65 = tpu.matmul %62, %64, %cst_40 {dimension_numbers = #tpu.dot_dimension_numbers<[1], [0], [0], [1], [0, 0, 1, 1], [], []>} : vector<32x144xbf16>, vector<144x144xbf16>, vector<32x144xf32> -> vector<32x144xf32>
    %66 = arith.addf %60, %65 : vector<32x144xf32>
    %67 = vector.extract_strided_slice %0 {offsets = [0, 2, 0], sizes = [2, 16, 144], strides = [1, 1, 1]} : vector<2x18x144xbf16> to vector<2x16x144xbf16>
    %68 = vector.shape_cast %67 : vector<2x16x144xbf16> to vector<32x144xbf16>
    %c2_41 = arith.constant 2 : index
    %c0_42 = arith.constant 0 : index
    %c0_43 = arith.constant 0 : index
    %69 = vector.load %arg6[%c2_41, %c0_42, %c0_43] : memref<3x144x144xbf16, #tpu.memory_space<vmem>>, vector<1x144x144xbf16>
    %70 = vector.shape_cast %69 : vector<1x144x144xbf16> to vector<144x144xbf16>
    %cst_44 = arith.constant dense<0.000000e+00> : vector<32x144xf32>
    %71 = tpu.matmul %68, %70, %cst_44 {dimension_numbers = #tpu.dot_dimension_numbers<[1], [0], [0], [1], [0, 0, 1, 1], [], []>} : vector<32x144xbf16>, vector<144x144xbf16>, vector<32x144xf32> -> vector<32x144xf32>
    %72 = arith.addf %66, %71 : vector<32x144xf32>
    %c0_45 = arith.constant 0 : index
    %c0_46 = arith.constant 0 : index
    %73 = vector.load %arg7[%c0_45, %c0_46] : memref<1x144xf32, #tpu.memory_space<vmem>>, vector<1x144xf32>
    %74 = vector.broadcast %73 : vector<1x144xf32> to vector<32x144xf32>
    %75 = arith.addf %72, %74 : vector<32x144xf32>
    %cst_47 = arith.constant 0.000000e+00 : f32
    %76 = vector.broadcast %cst_47 : f32 to vector<32x144xf32>
    %77 = arith.maximumf %75, %76 : vector<32x144xf32>
    %78 = vector.shape_cast %77 : vector<32x144xf32> to vector<2x16x144xf32>
    %79 = arith.addf %53, %78 : vector<2x16x144xf32>
    %cst_48 = arith.constant 5.000000e-01 : f32
    %80 = vector.broadcast %cst_48 : f32 to vector<2x16x144xf32>
    %81 = arith.mulf %79, %80 : vector<2x16x144xf32>
    %cst_49 = arith.constant 0.000000e+00 : f32
    %82 = vector.broadcast %cst_49 : f32 to vector<2x1x144xf32>
    %83 = tpu.concatenate %82, %81, %82 in 1 : vector<2x1x144xf32>, vector<2x16x144xf32>, vector<2x1x144xf32> -> vector<2x18x144xf32>
    %84 = arith.truncf %83 : vector<2x18x144xf32> to vector<2x18x144xbf16>
    %c0_50 = arith.constant 0 : index
    %c0_51 = arith.constant 0 : index
    %c0_52 = arith.constant 0 : index
    %85 = vector.load %arg8[%c0_50, %c0_51, %c0_52] : memref<2x18x144xbf16, #tpu.memory_space<vmem>>, vector<2x18x144xbf16>
    tpu.vector_store %arg8[%c0_50, %c0_51, %c0_52], %84 {strides = array<i32>} : memref<2x18x144xbf16, #tpu.memory_space<vmem>>, vector<2x18x144xbf16>,
    return
  }
  func.func @transform_0(%arg0: i32) -> (i32, i32, i32) {
    %c0_i32 = arith.constant 0 : i32
    %c0_i32_0 = arith.constant 0 : i32
    %c0_i32_1 = arith.constant 0 : i32
    return %arg0, %c0_i32, %c0_i32_0 : i32, i32, i32
  }
  func.func @transform_1(%arg0: i32) -> (i32, i32, i32) {
    %c0_i32 = arith.constant 0 : i32
    %c0_i32_0 = arith.constant 0 : i32
    %c0_i32_1 = arith.constant 0 : i32
    %c0_i32_2 = arith.constant 0 : i32
    return %c0_i32, %c0_i32_0, %c0_i32_1 : i32, i32, i32
  }
  func.func @transform_2(%arg0: i32) -> (i32, i32) {
    %c0_i32 = arith.constant 0 : i32
    %c0_i32_0 = arith.constant 0 : i32
    %c0_i32_1 = arith.constant 0 : i32
    return %c0_i32, %c0_i32_0 : i32, i32
  }
  func.func @transform_3(%arg0: i32) -> (i32, i32, i32) {
    %c0_i32 = arith.constant 0 : i32
    %c0_i32_0 = arith.constant 0 : i32
    %c0_i32_1 = arith.constant 0 : i32
    %c0_i32_2 = arith.constant 0 : i32
    return %c0_i32, %c0_i32_0, %c0_i32_1 : i32, i32, i32
  }
  func.func @transform_4(%arg0: i32) -> (i32, i32) {
    %c0_i32 = arith.constant 0 : i32
    %c0_i32_0 = arith.constant 0 : i32
    %c0_i32_1 = arith.constant 0 : i32
    return %c0_i32, %c0_i32_0 : i32, i32
  }
  func.func @transform_5(%arg0: i32) -> (i32, i32, i32) {
    %c0_i32 = arith.constant 0 : i32
    %c0_i32_0 = arith.constant 0 : i32
    %c0_i32_1 = arith.constant 0 : i32
    %c0_i32_2 = arith.constant 0 : i32
    return %c0_i32, %c0_i32_0, %c0_i32_1 : i32, i32, i32
  }
  func.func @transform_6(%arg0: i32) -> (i32, i32) {
    %c0_i32 = arith.constant 0 : i32
    %c0_i32_0 = arith.constant 0 : i32
    %c0_i32_1 = arith.constant 0 : i32
    return %c0_i32, %c0_i32_0 : i32, i32
  }
  func.func @transform_7(%arg0: i32) -> (i32, i32, i32) {
    %c0_i32 = arith.constant 0 : i32
    %c0_i32_0 = arith.constant 0 : i32
    %c0_i32_1 = arith.constant 0 : i32
    return %arg0, %c0_i32, %c0_i32_0 : i32, i32, i32
  }
}

</mosaic_0001>

<llo_original>
// kernel: tpu_custom_call.1
$region0: #{tpu_custom_call.1}
  #allocation0 [shape = 'u32[]', space=smem, size = 0x4, offset = 0x4, fixed_abs, tag = 'smem constant byte address 0x4 - core index']
  #allocation1 [shape = 'u32[72,128]{1,0:T(1,128)}', space=vmem, size = 0x9000, scoped, tag = 'internal scratch']
  %s0 = inlined_call_operand.vmem [shape: bf16[2,18,144], index: 0, kind: input, shape index: {}]
  %s1 = inlined_call_operand.hbm [shape: bf16[3,144,144], index: 1, kind: input, shape index: {}]
  %s2 = inlined_call_operand.vmem [shape: f32[1,144], index: 2, kind: input, shape index: {}]
  %s3 = inlined_call_operand.hbm [shape: bf16[3,144,144], index: 3, kind: input, shape index: {}]
  %s4 = inlined_call_operand.vmem [shape: f32[1,144], index: 4, kind: input, shape index: {}]
  %s5 = inlined_call_operand.hbm [shape: bf16[3,144,144], index: 5, kind: input, shape index: {}]
  %s6 = inlined_call_operand.vmem [shape: f32[1,144], index: 6, kind: input, shape index: {}]
  %s7 = inlined_call_operand.vmem [shape: bf16[2,18,144], index: 7, kind: output, shape index: {}]
  %s8 = sld [smem:[#allocation0]]
  $region50: #{tpu_custom_call.1} parent=0
    _
  %s10 = ssub.s32 1, %s8
  %s11 = scalar_select 0, %s10, %s8
  $region1: #{tpu_custom_call.1} parent=0
    #allocation2 [shape = 'u8[221184]{0}', space=vmem, size = 0x36000, scoped, tag = 'input window, operand 1, single buffered']
    #allocation3 [shape = 's32[1]{0}', space=sflag, size = 0x4, scoped, tag = 'scoped memory for tpu_custom_call.1']
    #allocation4 [shape = 'u8[221184]{0}', space=vmem, size = 0x36000, scoped, tag = 'input window, operand 3, single buffered']
    #allocation5 [shape = 's32[1]{0}', space=sflag, size = 0x4, scoped, tag = 'scoped memory for tpu_custom_call.1']
    #allocation6 [shape = 'u8[221184]{0}', space=vmem, size = 0x36000, scoped, tag = 'input window, operand 5, single buffered']
    %12 = vsyncpa [#allocation3], 0
    %13 = vsyncpa [#allocation5], 0
    // Predicated region
    $region2: #{tpu_custom_call.1} parent=1 // pred_check
      _
    $region3: #{tpu_custom_call.1} parent=1 // pred_check_branch
      %15 = sbr.rel (0) target = $region5
    $region4: #{tpu_custom_call.1} parent=1 // pred_region
      _
    $region5: #{tpu_custom_call.1} parent=1 // pred_fallthru
      _
    // Predicated region
    $region6: #{tpu_custom_call.1} parent=1 // pred_check
      _
    $region7: #{tpu_custom_call.1} parent=1 // pred_check_branch
      %17 = sbr.rel (0) target = $region9
    $region8: #{tpu_custom_call.1} parent=1 // pred_region
      %19 = vsyncadd [#allocation3], 0
      %s20 = sshll.u32 %s1, 4
      %s21 = int_to_ptr.hbm [resolvable:$true] %s20
      %s22 = sshll.u32 [#allocation2], 4
      %s23 = int_to_ptr.vmem [resolvable:$true] %s22
      %28 = dma.hbm_to_vmem [thread:$0]  %s21, 6912, %s23, [#allocation3], 128, 128, 8
    $region9: #{tpu_custom_call.1} parent=1 // pred_fallthru
      _
    // Predicated region
    $region10: #{tpu_custom_call.1} parent=1 // pred_check
      _
    $region11: #{tpu_custom_call.1} parent=1 // pred_check_branch
      %30 = sbr.rel (0) target = $region13
    $region12: #{tpu_custom_call.1} parent=1 // pred_region
      _
    $region13: #{tpu_custom_call.1} parent=1 // pred_fallthru
      _
    // Predicated region
    $region14: #{tpu_custom_call.1} parent=1 // pred_check
      _
    $region15: #{tpu_custom_call.1} parent=1 // pred_check_branch
      %32 = sbr.rel (0) target = $region17
    $region16: #{tpu_custom_call.1} parent=1 // pred_region
      %34 = vsyncadd [#allocation5], 0
      %s35 = sshll.u32 %s3, 4
      %s36 = int_to_ptr.hbm [resolvable:$true] %s35
      %s37 = sshll.u32 [#allocation4], 4
      %s38 = int_to_ptr.vmem [resolvable:$true] %s37
      %43 = dma.hbm_to_vmem [thread:$0]  %s36, 6912, %s38, [#allocation5], 128, 128, 8
    $region17: #{tpu_custom_call.1} parent=1 // pred_fallthru
      _
    // Predicated region
    $region18: #{tpu_custom_call.1} parent=1 // pred_check
      _
    $region19: #{tpu_custom_call.1} parent=1 // pred_check_branch
      %45 = sbr.rel (0) target = $region21
    $region20: #{tpu_custom_call.1} parent=1 // pred_region
      _
    $region21: #{tpu_custom_call.1} parent=1 // pred_fallthru
      _
    // Predicated region
    $region22: #{tpu_custom_call.1} parent=1 // pred_check
      _
    $region23: #{tpu_custom_call.1} parent=1 // pred_check_branch
      %47 = sbr.rel (0) target = $region25
    $region24: #{tpu_custom_call.1} parent=1 // pred_region
      %49 = vsyncadd [#allocation5], 0
      %s50 = sshll.u32 %s5, 4
      %s51 = int_to_ptr.hbm [resolvable:$true] %s50
      %s52 = sshll.u32 [#allocation6], 4
      %s53 = int_to_ptr.vmem [resolvable:$true] %s52
      %58 = dma.hbm_to_vmem [thread:$0]  %s51, 6912, %s53, [#allocation5], 128, 128, 8
    $region25: #{tpu_custom_call.1} parent=1 // pred_fallthru
      _
    // Predicated region
    $region26: #{tpu_custom_call.1} parent=1 // pred_check
      _
    $region27: #{tpu_custom_call.1} parent=1 // pred_check_branch
      %60 = sbr.rel (0) target = $region29
    $region28: #{tpu_custom_call.1} parent=1 // pred_region
      _
    $region29: #{tpu_custom_call.1} parent=1 // pred_fallthru
      _
    // Predicated region
    $region30: #{tpu_custom_call.1} parent=1 // pred_check
      _
    $region31: #{tpu_custom_call.1} parent=1 // pred_check_branch
      %62 = sbr.rel (0) target = $region33
    $region32: #{tpu_custom_call.1} parent=1 // pred_region
      %64 = dma.done [#allocation3], 6912
    $region33: #{tpu_custom_call.1} parent=1 // pred_fallthru
      _
    // Predicated region
    $region34: #{tpu_custom_call.1} parent=1 // pred_check
      _
    $region35: #{tpu_custom_call.1} parent=1 // pred_check_branch
      %66 = sbr.rel (0) target = $region37
    $region36: #{tpu_custom_call.1} parent=1 // pred_region
      %68 = dma.done [#allocation5], 6912
    $region37: #{tpu_custom_call.1} parent=1 // pred_fallthru
      _
    // Predicated region
    $region38: #{tpu_custom_call.1} parent=1 // pred_check
      _
    $region39: #{tpu_custom_call.1} parent=1 // pred_check_branch
      %70 = sbr.rel (0) target = $region41
    $region40: #{tpu_custom_call.1} parent=1 // pred_region
      %72 = dma.done [#allocation5], 6912
    $region41: #{tpu_custom_call.1} parent=1 // pred_fallthru
      _
    %v74 = vld [vmem:[%s0] sm:$0xff]
    %v75 = vld [vmem:[%s0 + $0x8] sm:$0xff]
    %v76 = vld [vmem:[%s0 + $0x10] sm:$0x11]
    %v77 = vld [vmem:[%s0 + $0x18] sm:$0xff]
    %v78 = vld [vmem:[%s0 + $0x20] sm:$0xff]
    %v79 = vld [vmem:[%s0 + $0x28] sm:$0x11]
    %v80 = vld [vmem:[#allocation2] sm:$0xff]
    %v81 = vld [vmem:[#allocation2 + $0x8] sm:$0xff]
    %v82 = vld [vmem:[#allocation2 + $0x10] sm:$0xff]
    %v83 = vld [vmem:[#allocation2 + $0x18] sm:$0xff]
    %v84 = vld [vmem:[#allocation2 + $0x20] sm:$0xff]
    %v85 = vld [vmem:[#allocation2 + $0x28] sm:$0xff]
    %v86 = vld [vmem:[#allocation2 + $0x30] sm:$0xff]
    %v87 = vld [vmem:[#allocation2 + $0x38] sm:$0xff]
    %v88 = vld [vmem:[#allocation2 + $0x40] sm:$0xff]
    %v89 = vld [vmem:[#allocation2 + $0x48] sm:$0xff]
    %v90 = vld [vmem:[#allocation2 + $0x50] sm:$0xff]
    %v91 = vld [vmem:[#allocation2 + $0x58] sm:$0xff]
    %v92 = vld [vmem:[#allocation2 + $0x60] sm:$0xff]
    %v93 = vld [vmem:[#allocation2 + $0x68] sm:$0xff]
    %v94 = vld [vmem:[#allocation2 + $0x70] sm:$0xff]
    %v95 = vld [vmem:[#allocation2 + $0x78] sm:$0xff]
    %v96 = vld [vmem:[#allocation2 + $0x80] sm:$0xff]
    %v97 = vld [vmem:[#allocation2 + $0x88] sm:$0xff]
    %vm98 = vsmask.f32 3328
    %vm99 = vsmask.f32 7440
    %vm100 = vmor %vm98, %vm99
    %v102 = vshrl.u32 %v74, 16
    %v104 = vrot.slane %v102, 4
    %v105 = vshll.u32 %v74, 16
    %v107 = vrot.slane %v105, 5
    %v108 = vor.u32 %v104, %v107
    %v109 = vrot.slane %v108, 4
    %v111 = vshll.u32 %v75, 16
    %v113 = vrot.slane %v111, 5
    %v114 = vsel %vm100, %v109, %v113
    %v115 = vshrl.u32 %v75, 16
    %v117 = vrot.slane %v115, 4
    %v118 = vor.u32 %v117, %v113
    %v119 = vrot.slane %v118, 4
    %v121 = vshll.u32 %v76, 16
    %v123 = vrot.slane %v121, 5
    %v124 = vsel %vm100, %v119, %v123
    %v126 = vshrl.u32 %v77, 16
    %v128 = vrot.slane %v126, 4
    %v129 = vshll.u32 %v77, 16
    %v131 = vrot.slane %v129, 5
    %v132 = vor.u32 %v128, %v131
    %v133 = vrot.slane %v132, 4
    %v135 = vshll.u32 %v78, 16
    %v137 = vrot.slane %v135, 5
    %v138 = vsel %vm100, %v133, %v137
    %v139 = vshrl.u32 %v78, 16
    %v141 = vrot.slane %v139, 4
    %v142 = vor.u32 %v141, %v137
    %v143 = vrot.slane %v142, 4
    %v145 = vshll.u32 %v79, 16
    %v147 = vrot.slane %v145, 5
    %v148 = vsel %vm100, %v143, %v147
    %s149 = scalar_lea.vmem [#allocation2], 144
    %v150 = vld [vmem:[%s149] sm:$0xff]
    %v151 = vld [vmem:[%s149 + $0x8] sm:$0xff]
    %v152 = vld [vmem:[%s149 + $0x10] sm:$0xff]
    %v153 = vld [vmem:[%s149 + $0x18] sm:$0xff]
    %v154 = vld [vmem:[%s149 + $0x20] sm:$0xff]
    %v155 = vld [vmem:[%s149 + $0x28] sm:$0xff]
    %v156 = vld [vmem:[%s149 + $0x30] sm:$0xff]
    %v157 = vld [vmem:[%s149 + $0x38] sm:$0xff]
    %v158 = vld [vmem:[%s149 + $0x40] sm:$0xff]
    %v159 = vld [vmem:[%s149 + $0x48] sm:$0xff]
    %v160 = vld [vmem:[%s149 + $0x50] sm:$0xff]
    %v161 = vld [vmem:[%s149 + $0x58] sm:$0xff]
    %v162 = vld [vmem:[%s149 + $0x60] sm:$0xff]
    %v163 = vld [vmem:[%s149 + $0x68] sm:$0xff]
    %v164 = vld [vmem:[%s149 + $0x70] sm:$0xff]
    %v165 = vld [vmem:[%s149 + $0x78] sm:$0xff]
    %v166 = vld [vmem:[%s149 + $0x80] sm:$0xff]
    %v167 = vld [vmem:[%s149 + $0x88] sm:$0xff]
    %v168 = vunpack.c.l.b16 %v114
    %v169 = vunpack.c.h.b16 %v114
    %v170 = vunpack.c.l.b16 %v124
    %v171 = vunpack.c.h.b16 %v124
    %v172 = vunpack.c.l.b16 %v138
    %v173 = vunpack.c.h.b16 %v138
    %v174 = vunpack.c.l.b16 %v148
    %v175 = vunpack.c.h.b16 %v148
    %v176 = vpack.c.b16 %v170, %v168
    %v177 = vpack.c.b16 %v171, %v169
    %v178 = vpack.c.b16 %v174, %v172
    %v179 = vpack.c.b16 %v175, %v173
    %v200 = vunpack.c.l.b16 %v150
    %v201 = vunpack.c.h.b16 %v150
    %v202 = vunpack.c.l.b16 %v151
    %v203 = vunpack.c.h.b16 %v151
    %v204 = vunpack.c.l.b16 %v152
    %v205 = vunpack.c.h.b16 %v152
    %v206 = vunpack.c.l.b16 %v153
    %v207 = vunpack.c.h.b16 %v153
    %v208 = vunpack.c.l.b16 %v154
    %v209 = vunpack.c.h.b16 %v154
    %v210 = vunpack.c.l.b16 %v155
    %v211 = vunpack.c.h.b16 %v155
    %v212 = vunpack.c.l.b16 %v156
    %v213 = vunpack.c.h.b16 %v156
    %v214 = vunpack.c.l.b16 %v157
    %v215 = vunpack.c.h.b16 %v157
    %v216 = vunpack.c.l.b16 %v158
    %v217 = vunpack.c.h.b16 %v158
    %v218 = vunpack.c.l.b16 %v159
    %v219 = vunpack.c.h.b16 %v159
    %v220 = vunpack.c.l.b16 %v160
    %v221 = vunpack.c.h.b16 %v160
    %v222 = vunpack.c.l.b16 %v161
    %v223 = vunpack.c.h.b16 %v161
    %v224 = vunpack.c.l.b16 %v162
    %v225 = vunpack.c.h.b16 %v162
    %v226 = vunpack.c.l.b16 %v163
    %v227 = vunpack.c.h.b16 %v163
    %v228 = vunpack.c.l.b16 %v164
    %v229 = vunpack.c.h.b16 %v164
    %v230 = vunpack.c.l.b16 %v165
    %v231 = vunpack.c.h.b16 %v165
    %v232 = vunpack.c.l.b16 %v166
    %v233 = vunpack.c.h.b16 %v166
    %v234 = vunpack.c.l.b16 %v167
    %v235 = vunpack.c.h.b16 %v167
    %v236 = vpack.c.b16 %v202, %v200
    %v237 = vpack.c.b16 %v203, %v201
    %v238 = vpack.c.b16 %v206, %v204
    %v239 = vpack.c.b16 %v207, %v205
    %v240 = vpack.c.b16 %v210, %v208
    %v241 = vpack.c.b16 %v211, %v209
    %v242 = vpack.c.b16 %v214, %v212
    %v243 = vpack.c.b16 %v215, %v213
    %v244 = vpack.c.b16 %v218, %v216
    %v245 = vpack.c.b16 %v219, %v217
    %v246 = vpack.c.b16 %v222, %v220
    %v247 = vpack.c.b16 %v223, %v221
    %v248 = vpack.c.b16 %v226, %v224
    %v249 = vpack.c.b16 %v227, %v225
    %v250 = vpack.c.b16 %v230, %v228
    %v251 = vpack.c.b16 %v231, %v229
    %v252 = vpack.c.b16 %v234, %v232
    %v253 = vpack.c.b16 %v235, %v233
    %vm272 = vcmask 130048
    %v274 = vsel %vm272, %v177, 0
    %v277 = vsel %vm272, %v179, 0
    %279 = vmatpush.bf16.msra.mxu0 %v250
    %280 = vmatpush.bf16.msra.mxu0 %v248
    %281 = vmatpush.bf16.msra.mxu0 %v246
    %282 = vmatpush.bf16.msra.mxu0 %v244
    %283 = vmatpush.bf16.msra.mxu0 %v242
    %284 = vmatpush.bf16.msra.mxu0 %v240
    %285 = vmatpush.bf16.msra.mxu0 %v238
    %286 = vmatpush.bf16.msra.mxu0 %v236
    %287 = vmatmul.bf16.gmra.mxu0 %v176
    %v288 = vpop.f32.mrf.mxu0
    %v289 = vadd.f32 0.0, %v288
    %v290 = vpop.f32.mrf.mxu0
    %v291 = vadd.f32 0.0, %v290
    %292 = vmatmul.bf16.gmra.mxu0 %v178
    %v293 = vpop.f32.mrf.mxu0
    %v294 = vadd.f32 0.0, %v293
    %v295 = vpop.f32.mrf.mxu0
    %v296 = vadd.f32 0.0, %v295
    %297 = vdwg.mxu0
    %298 = vmatpush.bf16.msra.mxu0 0
    %299 = vmatpush.bf16.msra.mxu0 0
    %300 = vmatpush.bf16.msra.mxu0 0
    %301 = vmatpush.bf16.msra.mxu0 0
    %302 = vmatpush.bf16.msra.mxu0 0
    %303 = vmatpush.bf16.msra.mxu0 0
    %304 = vmatpush.bf16.msra.mxu0 0
    %305 = vmatpush.bf16.msra.mxu0 %v252
    %306 = vmatmul.bf16.gmra.mxu0 %v274
    %v307 = vpop.f32.mrf.mxu0
    %v308 = vadd.f32 %v289, %v307
    %v309 = vpop.f32.mrf.mxu0
    %v310 = vadd.f32 %v291, %v309
    %311 = vmatmul.bf16.gmra.mxu0 %v277
    %v312 = vpop.f32.mrf.mxu0
    %v313 = vadd.f32 %v294, %v312
    %v314 = vpop.f32.mrf.mxu0
    %v315 = vadd.f32 %v296, %v314
    %316 = vdwg.mxu0
    %317 = vmatpush.bf16.msra.mxu0 %v251
    %318 = vmatpush.bf16.msra.mxu0 %v249
    %319 = vmatpush.bf16.msra.mxu0 %v247
    %320 = vmatpush.bf16.msra.mxu0 %v245
    %321 = vmatpush.bf16.msra.mxu0 %v243
    %322 = vmatpush.bf16.msra.mxu0 %v241
    %323 = vmatpush.bf16.msra.mxu0 %v239
    %324 = vmatpush.bf16.msra.mxu0 %v237
    %325 = vmatmul.bf16.gmra.mxu0 %v176
    %v326 = vpop.f32.mrf.mxu0
    %v327 = vadd.f32 0.0, %v326
    %v328 = vpop.f32.mrf.mxu0
    %v329 = vadd.f32 0.0, %v328
    %330 = vmatmul.bf16.gmra.mxu0 %v178
    %v331 = vpop.f32.mrf.mxu0
    %v332 = vadd.f32 0.0, %v331
    %v333 = vpop.f32.mrf.mxu0
    %v334 = vadd.f32 0.0, %v333
    %335 = vdwg.mxu0
    %336 = vmatpush.bf16.msra.mxu0 0
    %337 = vmatpush.bf16.msra.mxu0 0
    %338 = vmatpush.bf16.msra.mxu0 0
    %339 = vmatpush.bf16.msra.mxu0 0
    %340 = vmatpush.bf16.msra.mxu0 0
    %341 = vmatpush.bf16.msra.mxu0 0
    %342 = vmatpush.bf16.msra.mxu0 0
    %343 = vmatpush.bf16.msra.mxu0 %v253
    %344 = vmatmul.bf16.gmra.mxu0 %v274
    %v345 = vpop.f32.mrf.mxu0
    %v346 = vadd.f32 %v327, %v345
    %v347 = vpop.f32.mrf.mxu0
    %v348 = vadd.f32 %v329, %v347
    %349 = vmatmul.bf16.gmra.mxu0 %v277
    %v350 = vpop.f32.mrf.mxu0
    %v351 = vadd.f32 %v332, %v350
    %v352 = vpop.f32.mrf.mxu0
    %v353 = vadd.f32 %v334, %v352
    %354 = vdwg.mxu0
    %v359 = vunpack.c.l.b16 %v74
    %v360 = vunpack.c.h.b16 %v74
    %v361 = vunpack.c.l.b16 %v75
    %v362 = vunpack.c.h.b16 %v75
    %v363 = vunpack.c.l.b16 %v77
    %v364 = vunpack.c.h.b16 %v77
    %v365 = vunpack.c.l.b16 %v78
    %v366 = vunpack.c.h.b16 %v78
    %v367 = vpack.c.b16 %v361, %v359
    %v368 = vpack.c.b16 %v362, %v360
    %v369 = vpack.c.b16 %v365, %v363
    %v370 = vpack.c.b16 %v366, %v364
    %v391 = vunpack.c.l.b16 %v80
    %v392 = vunpack.c.h.b16 %v80
    %v393 = vunpack.c.l.b16 %v81
    %v394 = vunpack.c.h.b16 %v81
    %v395 = vunpack.c.l.b16 %v82
    %v396 = vunpack.c.h.b16 %v82
    %v397 = vunpack.c.l.b16 %v83
    %v398 = vunpack.c.h.b16 %v83
    %v399 = vunpack.c.l.b16 %v84
    %v400 = vunpack.c.h.b16 %v84
    %v401 = vunpack.c.l.b16 %v85
    %v402 = vunpack.c.h.b16 %v85
    %v403 = vunpack.c.l.b16 %v86
    %v404 = vunpack.c.h.b16 %v86
    %v405 = vunpack.c.l.b16 %v87
    %v406 = vunpack.c.h.b16 %v87
    %v407 = vunpack.c.l.b16 %v88
    %v408 = vunpack.c.h.b16 %v88
    %v409 = vunpack.c.l.b16 %v89
    %v410 = vunpack.c.h.b16 %v89
    %v411 = vunpack.c.l.b16 %v90
    %v412 = vunpack.c.h.b16 %v90
    %v413 = vunpack.c.l.b16 %v91
    %v414 = vunpack.c.h.b16 %v91
    %v415 = vunpack.c.l.b16 %v92
    %v416 = vunpack.c.h.b16 %v92
    %v417 = vunpack.c.l.b16 %v93
    %v418 = vunpack.c.h.b16 %v93
    %v419 = vunpack.c.l.b16 %v94
    %v420 = vunpack.c.h.b16 %v94
    %v421 = vunpack.c.l.b16 %v95
    %v422 = vunpack.c.h.b16 %v95
    %v423 = vunpack.c.l.b16 %v96
    %v424 = vunpack.c.h.b16 %v96
    %v425 = vunpack.c.l.b16 %v97
    %v426 = vunpack.c.h.b16 %v97
    %v427 = vpack.c.b16 %v393, %v391
    %v428 = vpack.c.b16 %v394, %v392
    %v429 = vpack.c.b16 %v397, %v395
    %v430 = vpack.c.b16 %v398, %v396
    %v431 = vpack.c.b16 %v401, %v399
    %v432 = vpack.c.b16 %v402, %v400
    %v433 = vpack.c.b16 %v405, %v403
    %v434 = vpack.c.b16 %v406, %v404
    %v435 = vpack.c.b16 %v409, %v407
    %v436 = vpack.c.b16 %v410, %v408
    %v437 = vpack.c.b16 %v413, %v411
    %v438 = vpack.c.b16 %v414, %v412
    %v439 = vpack.c.b16 %v417, %v415
    %v440 = vpack.c.b16 %v418, %v416
    %v441 = vpack.c.b16 %v421, %v419
    %v442 = vpack.c.b16 %v422, %v420
    %v443 = vpack.c.b16 %v425, %v423
    %v444 = vpack.c.b16 %v426, %v424
    %v464 = vsel %vm272, %v368, 0
    %v467 = vsel %vm272, %v370, 0
    %469 = vmatpush.bf16.msra.mxu0 %v441
    %470 = vmatpush.bf16.msra.mxu0 %v439
    %471 = vmatpush.bf16.msra.mxu0 %v437
    %472 = vmatpush.bf16.msra.mxu0 %v435
    %473 = vmatpush.bf16.msra.mxu0 %v433
    %474 = vmatpush.bf16.msra.mxu0 %v431
    %475 = vmatpush.bf16.msra.mxu0 %v429
    %476 = vmatpush.bf16.msra.mxu0 %v427
    %477 = vmatmul.bf16.gmra.mxu0 %v367
    %v478 = vpop.f32.mrf.mxu0
    %v479 = vadd.f32 %v308, %v478
    %v480 = vpop.f32.mrf.mxu0
    %v481 = vadd.f32 %v310, %v480
    %482 = vmatmul.bf16.gmra.mxu0 %v369
    %v483 = vpop.f32.mrf.mxu0
    %v484 = vadd.f32 %v313, %v483
    %v485 = vpop.f32.mrf.mxu0
    %v486 = vadd.f32 %v315, %v485
    %487 = vdwg.mxu0
    %488 = vmatpush.bf16.msra.mxu0 0
    %489 = vmatpush.bf16.msra.mxu0 0
    %490 = vmatpush.bf16.msra.mxu0 0
    %491 = vmatpush.bf16.msra.mxu0 0
    %492 = vmatpush.bf16.msra.mxu0 0
    %493 = vmatpush.bf16.msra.mxu0 0
    %494 = vmatpush.bf16.msra.mxu0 0
    %495 = vmatpush.bf16.msra.mxu0 %v443
    %496 = vmatmul.bf16.gmra.mxu0 %v464
    %v497 = vpop.f32.mrf.mxu0
    %v498 = vadd.f32 %v479, %v497
    %v499 = vpop.f32.mrf.mxu0
    %v500 = vadd.f32 %v481, %v499
    %501 = vmatmul.bf16.gmra.mxu0 %v467
    %v502 = vpop.f32.mrf.mxu0
    %v503 = vadd.f32 %v484, %v502
    %v504 = vpop.f32.mrf.mxu0
    %v505 = vadd.f32 %v486, %v504
    %506 = vdwg.mxu0
    %507 = vmatpush.bf16.msra.mxu0 %v442
    %508 = vmatpush.bf16.msra.mxu0 %v440
    %509 = vmatpush.bf16.msra.mxu0 %v438
    %510 = vmatpush.bf16.msra.mxu0 %v436
    %511 = vmatpush.bf16.msra.mxu0 %v434
    %512 = vmatpush.bf16.msra.mxu0 %v432
    %513 = vmatpush.bf16.msra.mxu0 %v430
    %514 = vmatpush.bf16.msra.mxu0 %v428
    %515 = vmatmul.bf16.gmra.mxu0 %v367
    %v516 = vpop.f32.mrf.mxu0
    %v517 = vadd.f32 %v346, %v516
    %v518 = vpop.f32.mrf.mxu0
    %v519 = vadd.f32 %v348, %v518
    %520 = vmatmul.bf16.gmra.mxu0 %v369
    %v521 = vpop.f32.mrf.mxu0
    %v522 = vadd.f32 %v351, %v521
    %v523 = vpop.f32.mrf.mxu0
    %v524 = vadd.f32 %v353, %v523
    %525 = vdwg.mxu0
    %526 = vmatpush.bf16.msra.mxu0 0
    %527 = vmatpush.bf16.msra.mxu0 0
    %528 = vmatpush.bf16.msra.mxu0 0
    %529 = vmatpush.bf16.msra.mxu0 0
    %530 = vmatpush.bf16.msra.mxu0 0
    %531 = vmatpush.bf16.msra.mxu0 0
    %532 = vmatpush.bf16.msra.mxu0 0
    %533 = vmatpush.bf16.msra.mxu0 %v444
    %534 = vmatmul.bf16.gmra.mxu0 %v464
    %v535 = vpop.f32.mrf.mxu0
    %v536 = vadd.f32 %v517, %v535
    %v537 = vpop.f32.mrf.mxu0
    %v538 = vadd.f32 %v519, %v537
    %539 = vmatmul.bf16.gmra.mxu0 %v467
    %v540 = vpop.f32.mrf.mxu0
    %v541 = vadd.f32 %v522, %v540
    %v542 = vpop.f32.mrf.mxu0
    %v543 = vadd.f32 %v524, %v542
    %544 = vdwg.mxu0
    %vm547 = vcmask 1042432
    %vm548 = vcmask 1046532
    %vm549 = vmor %vm547, %vm548
    %v550 = vrot.slane %v74, 5
    %v551 = vrot.slane %v550, 4
    %v552 = vrot.slane %v75, 5
    %v553 = vsel %vm549, %v551, %v552
    %v554 = vrot.slane %v552, 4
    %v555 = vrot.slane %v76, 5
    %v556 = vsel %vm549, %v554, %v555
    %v557 = vrot.slane %v77, 5
    %v558 = vrot.slane %v557, 4
    %v559 = vrot.slane %v78, 5
    %v560 = vsel %vm549, %v558, %v559
    %v561 = vrot.slane %v559, 4
    %v562 = vrot.slane %v79, 5
    %v563 = vsel %vm549, %v561, %v562
    %s564 = scalar_lea.vmem [#allocation2], 288
    %v565 = vld [vmem:[%s564] sm:$0xff]
    %v566 = vld [vmem:[%s564 + $0x8] sm:$0xff]
    %v567 = vld [vmem:[%s564 + $0x10] sm:$0xff]
    %v568 = vld [vmem:[%s564 + $0x18] sm:$0xff]
    %v569 = vld [vmem:[%s564 + $0x20] sm:$0xff]
    %v570 = vld [vmem:[%s564 + $0x28] sm:$0xff]
    %v571 = vld [vmem:[%s564 + $0x30] sm:$0xff]
    %v572 = vld [vmem:[%s564 + $0x38] sm:$0xff]
    %v573 = vld [vmem:[%s564 + $0x40] sm:$0xff]
    %v574 = vld [vmem:[%s564 + $0x48] sm:$0xff]
    %v575 = vld [vmem:[%s564 + $0x50] sm:$0xff]
    %v576 = vld [vmem:[%s564 + $0x58] sm:$0xff]
    %v577 = vld [vmem:[%s564 + $0x60] sm:$0xff]
    %v578 = vld [vmem:[%s564 + $0x68] sm:$0xff]
    %v579 = vld [vmem:[%s564 + $0x70] sm:$0xff]
    %v580 = vld [vmem:[%s564 + $0x78] sm:$0xff]
    %v581 = vld [vmem:[%s564 + $0x80] sm:$0xff]
    %v582 = vld [vmem:[%s564 + $0x88] sm:$0xff]
    %v583 = vunpack.c.l.b16 %v553
    %v584 = vunpack.c.h.b16 %v553
    %v585 = vunpack.c.l.b16 %v556
    %v586 = vunpack.c.h.b16 %v556
    %v587 = vunpack.c.l.b16 %v560
    %v588 = vunpack.c.h.b16 %v560
    %v589 = vunpack.c.l.b16 %v563
    %v590 = vunpack.c.h.b16 %v563
    %v591 = vpack.c.b16 %v585, %v583
    %v592 = vpack.c.b16 %v586, %v584
    %v593 = vpack.c.b16 %v589, %v587
    %v594 = vpack.c.b16 %v590, %v588
    %v615 = vunpack.c.l.b16 %v565
    %v616 = vunpack.c.h.b16 %v565
    %v617 = vunpack.c.l.b16 %v566
    %v618 = vunpack.c.h.b16 %v566
    %v619 = vunpack.c.l.b16 %v567
    %v620 = vunpack.c.h.b16 %v567
    %v621 = vunpack.c.l.b16 %v568
    %v622 = vunpack.c.h.b16 %v568
    %v623 = vunpack.c.l.b16 %v569
    %v624 = vunpack.c.h.b16 %v569
    %v625 = vunpack.c.l.b16 %v570
    %v626 = vunpack.c.h.b16 %v570
    %v627 = vunpack.c.l.b16 %v571
    %v628 = vunpack.c.h.b16 %v571
    %v629 = vunpack.c.l.b16 %v572
    %v630 = vunpack.c.h.b16 %v572
    %v631 = vunpack.c.l.b16 %v573
    %v632 = vunpack.c.h.b16 %v573
    %v633 = vunpack.c.l.b16 %v574
    %v634 = vunpack.c.h.b16 %v574
    %v635 = vunpack.c.l.b16 %v575
    %v636 = vunpack.c.h.b16 %v575
    %v637 = vunpack.c.l.b16 %v576
    %v638 = vunpack.c.h.b16 %v576
    %v639 = vunpack.c.l.b16 %v577
    %v640 = vunpack.c.h.b16 %v577
    %v641 = vunpack.c.l.b16 %v578
    %v642 = vunpack.c.h.b16 %v578
    %v643 = vunpack.c.l.b16 %v579
    %v644 = vunpack.c.h.b16 %v579
    %v645 = vunpack.c.l.b16 %v580
    %v646 = vunpack.c.h.b16 %v580
    %v647 = vunpack.c.l.b16 %v581
    %v648 = vunpack.c.h.b16 %v581
    %v649 = vunpack.c.l.b16 %v582
    %v650 = vunpack.c.h.b16 %v582
    %v651 = vpack.c.b16 %v617, %v615
    %v652 = vpack.c.b16 %v618, %v616
    %v653 = vpack.c.b16 %v621, %v619
    %v654 = vpack.c.b16 %v622, %v620
    %v655 = vpack.c.b16 %v625, %v623
    %v656 = vpack.c.b16 %v626, %v624
    %v657 = vpack.c.b16 %v629, %v627
    %v658 = vpack.c.b16 %v630, %v628
    %v659 = vpack.c.b16 %v633, %v631
    %v660 = vpack.c.b16 %v634, %v632
    %v661 = vpack.c.b16 %v637, %v635
    %v662 = vpack.c.b16 %v638, %v636
    %v663 = vpack.c.b16 %v641, %v639
    %v664 = vpack.c.b16 %v642, %v640
    %v665 = vpack.c.b16 %v645, %v643
    %v666 = vpack.c.b16 %v646, %v644
    %v667 = vpack.c.b16 %v649, %v647
    %v668 = vpack.c.b16 %v650, %v648
    %v688 = vsel %vm272, %v592, 0
    %v691 = vsel %vm272, %v594, 0
    %693 = vmatpush.bf16.msra.mxu0 %v665
    %694 = vmatpush.bf16.msra.mxu0 %v663
    %695 = vmatpush.bf16.msra.mxu0 %v661
    %696 = vmatpush.bf16.msra.mxu0 %v659
    %697 = vmatpush.bf16.msra.mxu0 %v657
    %698 = vmatpush.bf16.msra.mxu0 %v655
    %699 = vmatpush.bf16.msra.mxu0 %v653
    %700 = vmatpush.bf16.msra.mxu0 %v651
    %701 = vmatmul.bf16.gmra.mxu0 %v591
    %v702 = vpop.f32.mrf.mxu0
    %v703 = vadd.f32 0.0, %v702
    %v704 = vpop.f32.mrf.mxu0
    %v705 = vadd.f32 0.0, %v704
    %706 = vmatmul.bf16.gmra.mxu0 %v593
    %v707 = vpop.f32.mrf.mxu0
    %v708 = vadd.f32 0.0, %v707
    %v709 = vpop.f32.mrf.mxu0
    %v710 = vadd.f32 0.0, %v709
    %711 = vdwg.mxu0
    %712 = vmatpush.bf16.msra.mxu0 0
    %713 = vmatpush.bf16.msra.mxu0 0
    %714 = vmatpush.bf16.msra.mxu0 0
    %715 = vmatpush.bf16.msra.mxu0 0
    %716 = vmatpush.bf16.msra.mxu0 0
    %717 = vmatpush.bf16.msra.mxu0 0
    %718 = vmatpush.bf16.msra.mxu0 0
    %719 = vmatpush.bf16.msra.mxu0 %v667
    %720 = vmatmul.bf16.gmra.mxu0 %v688
    %v721 = vpop.f32.mrf.mxu0
    %v722 = vadd.f32 %v703, %v721
    %v723 = vpop.f32.mrf.mxu0
    %v724 = vadd.f32 %v705, %v723
    %725 = vmatmul.bf16.gmra.mxu0 %v691
    %v726 = vpop.f32.mrf.mxu0
    %v727 = vadd.f32 %v708, %v726
    %v728 = vpop.f32.mrf.mxu0
    %v729 = vadd.f32 %v710, %v728
    %730 = vdwg.mxu0
    %731 = vmatpush.bf16.msra.mxu0 %v666
    %732 = vmatpush.bf16.msra.mxu0 %v664
    %733 = vmatpush.bf16.msra.mxu0 %v662
    %734 = vmatpush.bf16.msra.mxu0 %v660
    %735 = vmatpush.bf16.msra.mxu0 %v658
    %736 = vmatpush.bf16.msra.mxu0 %v656
    %737 = vmatpush.bf16.msra.mxu0 %v654
    %738 = vmatpush.bf16.msra.mxu0 %v652
    %739 = vmatmul.bf16.gmra.mxu0 %v591
    %v740 = vpop.f32.mrf.mxu0
    %v741 = vadd.f32 0.0, %v740
    %v742 = vpop.f32.mrf.mxu0
    %v743 = vadd.f32 0.0, %v742
    %744 = vmatmul.bf16.gmra.mxu0 %v593
    %v745 = vpop.f32.mrf.mxu0
    %v746 = vadd.f32 0.0, %v745
    %v747 = vpop.f32.mrf.mxu0
    %v748 = vadd.f32 0.0, %v747
    %749 = vdwg.mxu0
    %750 = vmatpush.bf16.msra.mxu0 0
    %751 = vmatpush.bf16.msra.mxu0 0
    %752 = vmatpush.bf16.msra.mxu0 0
    %753 = vmatpush.bf16.msra.mxu0 0
    %754 = vmatpush.bf16.msra.mxu0 0
    %755 = vmatpush.bf16.msra.mxu0 0
    %756 = vmatpush.bf16.msra.mxu0 0
    %757 = vmatpush.bf16.msra.mxu0 %v668
    %758 = vmatmul.bf16.gmra.mxu0 %v688
    %v759 = vpop.f32.mrf.mxu0
    %v760 = vadd.f32 %v741, %v759
    %v761 = vpop.f32.mrf.mxu0
    %v762 = vadd.f32 %v743, %v761
    %763 = vmatmul.bf16.gmra.mxu0 %v691
    %v764 = vpop.f32.mrf.mxu0
    %v765 = vadd.f32 %v746, %v764
    %v766 = vpop.f32.mrf.mxu0
    %v767 = vadd.f32 %v748, %v766
    %768 = vdwg.mxu0
    %v769 = vadd.f32 %v498, %v722
    %v770 = vadd.f32 %v536, %v760
    %v771 = vadd.f32 %v500, %v724
    %v772 = vadd.f32 %v538, %v762
    %v773 = vadd.f32 %v503, %v727
    %v774 = vadd.f32 %v541, %v765
    %v775 = vadd.f32 %v505, %v729
    %v776 = vadd.f32 %v543, %v767
    %v777 = vld [vmem:[%s2] sm:$0x3]
    %v779 = vperm.slane %v777, 0
    %v780 = vperm.slane %v777, 1
    %v783 = vadd.f32 %v769, %v779
    %v784 = vadd.f32 %v770, %v780
    %v785 = vadd.f32 %v771, %v779
    %v786 = vadd.f32 %v772, %v780
    %v787 = vadd.f32 %v773, %v779
    %v788 = vadd.f32 %v774, %v780
    %v789 = vadd.f32 %v775, %v779
    %v790 = vadd.f32 %v776, %v780
    %v791 = vmax.f32 %v783, 0.0
    %v792 = vmax.f32 %v784, 0.0
    %v793 = vmax.f32 %v785, 0.0
    %v794 = vmax.f32 %v786, 0.0
    %v795 = vmax.f32 %v787, 0.0
    %v796 = vmax.f32 %v788, 0.0
    %v797 = vmax.f32 %v789, 0.0
    %v798 = vmax.f32 %v790, 0.0
    %vm807 = vcmask 1040384
    %v808 = vrot.slane %v791, 7
    %v809 = vrot.slane %v792, 7
    %v810 = vrot.slane %v793, 7
    %v811 = vsel %vm807, %v808, %v810
    %v812 = vrot.slane %v794, 7
    %v813 = vsel %vm807, %v809, %v812
    %v814 = vrot.slane %v795, 7
    %v815 = vrot.slane %v796, 7
    %v816 = vrot.slane %v797, 7
    %v817 = vsel %vm807, %v814, %v816
    %v818 = vrot.slane %v798, 7
    %v819 = vsel %vm807, %v815, %v818
    %v832 = vsel %vm807, 0.0, %v808
    %v833 = vsel %vm807, 0.0, %v809
    %v834 = vsel %vm807, 0.0, %v814
    %v835 = vsel %vm807, 0.0, %v815
    %v836 = vsel %vm807, %v810, 0.0
    %v837 = vsel %vm807, %v812, 0.0
    %v838 = vsel %vm807, %v816, 0.0
    %v839 = vsel %vm807, %v818, 0.0
    %v840 = vpack.c.bf16 %v833, %v832
    %v841 = vpack.c.bf16 %v813, %v811
    %v842 = vpack.c.bf16 %v837, %v836
    %v843 = vpack.c.bf16 %v835, %v834
    %v844 = vpack.c.bf16 %v819, %v817
    %v845 = vpack.c.bf16 %v839, %v838
    %v846 = vld [vmem:[#allocation4] sm:$0xff]
    %v847 = vld [vmem:[#allocation4 + $0x8] sm:$0xff]
    %v848 = vld [vmem:[#allocation4 + $0x10] sm:$0xff]
    %v849 = vld [vmem:[#allocation4 + $0x18] sm:$0xff]
    %v850 = vld [vmem:[#allocation4 + $0x20] sm:$0xff]
    %v851 = vld [vmem:[#allocation4 + $0x28] sm:$0xff]
    %v852 = vld [vmem:[#allocation4 + $0x30] sm:$0xff]
    %v853 = vld [vmem:[#allocation4 + $0x38] sm:$0xff]
    %v854 = vld [vmem:[#allocation4 + $0x40] sm:$0xff]
    %v855 = vld [vmem:[#allocation4 + $0x48] sm:$0xff]
    %v856 = vld [vmem:[#allocation4 + $0x50] sm:$0xff]
    %v857 = vld [vmem:[#allocation4 + $0x58] sm:$0xff]
    %v858 = vld [vmem:[#allocation4 + $0x60] sm:$0xff]
    %v859 = vld [vmem:[#allocation4 + $0x68] sm:$0xff]
    %v860 = vld [vmem:[#allocation4 + $0x70] sm:$0xff]
    %v861 = vld [vmem:[#allocation4 + $0x78] sm:$0xff]
    %v862 = vld [vmem:[#allocation4 + $0x80] sm:$0xff]
    %v863 = vld [vmem:[#allocation4 + $0x88] sm:$0xff]
    %v865 = vshrl.u32 %v840, 16
    %v867 = vrot.slane %v865, 4
    %v868 = vshll.u32 %v840, 16
    %v870 = vrot.slane %v868, 5
    %v871 = vor.u32 %v867, %v870
    %v872 = vrot.slane %v871, 4
    %v874 = vshll.u32 %v841, 16
    %v876 = vrot.slane %v874, 5
    %v877 = vsel %vm100, %v872, %v876
    %v878 = vshrl.u32 %v841, 16
    %v880 = vrot.slane %v878, 4
    %v881 = vor.u32 %v880, %v876
    %v882 = vrot.slane %v881, 4
    %v884 = vshll.u32 %v842, 16
    %v886 = vrot.slane %v884, 5
    %v887 = vsel %vm100, %v882, %v886
    %v889 = vshrl.u32 %v843, 16
    %v891 = vrot.slane %v889, 4
    %v892 = vshll.u32 %v843, 16
    %v894 = vrot.slane %v892, 5
    %v895 = vor.u32 %v891, %v894
    %v896 = vrot.slane %v895, 4
    %v898 = vshll.u32 %v844, 16
    %v900 = vrot.slane %v898, 5
    %v901 = vsel %vm100, %v896, %v900
    %v902 = vshrl.u32 %v844, 16
    %v904 = vrot.slane %v902, 4
    %v905 = vor.u32 %v904, %v900
    %v906 = vrot.slane %v905, 4
    %v908 = vshll.u32 %v845, 16
    %v910 = vrot.slane %v908, 5
    %v911 = vsel %vm100, %v906, %v910
    %s912 = scalar_lea.vmem [#allocation4], 144
    %v913 = vld [vmem:[%s912] sm:$0xff]
    %v914 = vld [vmem:[%s912 + $0x8] sm:$0xff]
    %v915 = vld [vmem:[%s912 + $0x10] sm:$0xff]
    %v916 = vld [vmem:[%s912 + $0x18] sm:$0xff]
    %v917 = vld [vmem:[%s912 + $0x20] sm:$0xff]
    %v918 = vld [vmem:[%s912 + $0x28] sm:$0xff]
    %v919 = vld [vmem:[%s912 + $0x30] sm:$0xff]
    %v920 = vld [vmem:[%s912 + $0x38] sm:$0xff]
    %v921 = vld [vmem:[%s912 + $0x40] sm:$0xff]
    %v922 = vld [vmem:[%s912 + $0x48] sm:$0xff]
    %v923 = vld [vmem:[%s912 + $0x50] sm:$0xff]
    %v924 = vld [vmem:[%s912 + $0x58] sm:$0xff]
    %v925 = vld [vmem:[%s912 + $0x60] sm:$0xff]
    %v926 = vld [vmem:[%s912 + $0x68] sm:$0xff]
    %v927 = vld [vmem:[%s912 + $0x70] sm:$0xff]
    %v928 = vld [vmem:[%s912 + $0x78] sm:$0xff]
    %v929 = vld [vmem:[%s912 + $0x80] sm:$0xff]
    %v930 = vld [vmem:[%s912 + $0x88] sm:$0xff]
    %v931 = vunpack.c.l.b16 %v877
    %v932 = vunpack.c.h.b16 %v877
    %v933 = vunpack.c.l.b16 %v887
    %v934 = vunpack.c.h.b16 %v887
    %v935 = vunpack.c.l.b16 %v901
    %v936 = vunpack.c.h.b16 %v901
    %v937 = vunpack.c.l.b16 %v911
    %v938 = vunpack.c.h.b16 %v911
    %v939 = vpack.c.b16 %v933, %v931
    %v940 = vpack.c.b16 %v934, %v932
    %v941 = vpack.c.b16 %v937, %v935
    %v942 = vpack.c.b16 %v938, %v936
    %v963 = vunpack.c.l.b16 %v913
    %v964 = vunpack.c.h.b16 %v913
    %v965 = vunpack.c.l.b16 %v914
    %v966 = vunpack.c.h.b16 %v914
    %v967 = vunpack.c.l.b16 %v915
    %v968 = vunpack.c.h.b16 %v915
    %v969 = vunpack.c.l.b16 %v916
    %v970 = vunpack.c.h.b16 %v916
    %v971 = vunpack.c.l.b16 %v917
    %v972 = vunpack.c.h.b16 %v917
    %v973 = vunpack.c.l.b16 %v918
    %v974 = vunpack.c.h.b16 %v918
    %v975 = vunpack.c.l.b16 %v919
    %v976 = vunpack.c.h.b16 %v919
    %v977 = vunpack.c.l.b16 %v920
    %v978 = vunpack.c.h.b16 %v920
    %v979 = vunpack.c.l.b16 %v921
    %v980 = vunpack.c.h.b16 %v921
    %v981 = vunpack.c.l.b16 %v922
    %v982 = vunpack.c.h.b16 %v922
    %v983 = vunpack.c.l.b16 %v923
    %v984 = vunpack.c.h.b16 %v923
    %v985 = vunpack.c.l.b16 %v924
    %v986 = vunpack.c.h.b16 %v924
    %v987 = vunpack.c.l.b16 %v925
    %v988 = vunpack.c.h.b16 %v925
    %v989 = vunpack.c.l.b16 %v926
    %v990 = vunpack.c.h.b16 %v926
    %v991 = vunpack.c.l.b16 %v927
    %v992 = vunpack.c.h.b16 %v927
    %v993 = vunpack.c.l.b16 %v928
    %v994 = vunpack.c.h.b16 %v928
    %v995 = vunpack.c.l.b16 %v929
    %v996 = vunpack.c.h.b16 %v929
    %v997 = vunpack.c.l.b16 %v930
    %v998 = vunpack.c.h.b16 %v930
    %v999 = vpack.c.b16 %v965, %v963
    %v1000 = vpack.c.b16 %v966, %v964
    %v1001 = vpack.c.b16 %v969, %v967
    %v1002 = vpack.c.b16 %v970, %v968
    %v1003 = vpack.c.b16 %v973, %v971
    %v1004 = vpack.c.b16 %v974, %v972
    %v1005 = vpack.c.b16 %v977, %v975
    %v1006 = vpack.c.b16 %v978, %v976
    %v1007 = vpack.c.b16 %v981, %v979
    %v1008 = vpack.c.b16 %v982, %v980
    %v1009 = vpack.c.b16 %v985, %v983
    %v1010 = vpack.c.b16 %v986, %v984
    %v1011 = vpack.c.b16 %v989, %v987
    %v1012 = vpack.c.b16 %v990, %v988
    %v1013 = vpack.c.b16 %v993, %v991
    %v1014 = vpack.c.b16 %v994, %v992
    %v1015 = vpack.c.b16 %v997, %v995
    %v1016 = vpack.c.b16 %v998, %v996
    %v1036 = vsel %vm272, %v940, 0
    %v1039 = vsel %vm272, %v942, 0
    %1041 = vmatpush.bf16.msra.mxu0 %v1013
    %1042 = vmatpush.bf16.msra.mxu0 %v1011
    %1043 = vmatpush.bf16.msra.mxu0 %v1009
    %1044 = vmatpush.bf16.msra.mxu0 %v1007
    %1045 = vmatpush.bf16.msra.mxu0 %v1005
    %1046 = vmatpush.bf16.msra.mxu0 %v1003
    %1047 = vmatpush.bf16.msra.mxu0 %v1001
    %1048 = vmatpush.bf16.msra.mxu0 %v999
    %1049 = vmatmul.bf16.gmra.mxu0 %v939
    %v1050 = vpop.f32.mrf.mxu0
    %v1051 = vadd.f32 0.0, %v1050
    %v1052 = vpop.f32.mrf.mxu0
    %v1053 = vadd.f32 0.0, %v1052
    %1054 = vmatmul.bf16.gmra.mxu0 %v941
    %v1055 = vpop.f32.mrf.mxu0
    %v1056 = vadd.f32 0.0, %v1055
    %v1057 = vpop.f32.mrf.mxu0
    %v1058 = vadd.f32 0.0, %v1057
    %1059 = vdwg.mxu0
    %1060 = vmatpush.bf16.msra.mxu0 0
    %1061 = vmatpush.bf16.msra.mxu0 0
    %1062 = vmatpush.bf16.msra.mxu0 0
    %1063 = vmatpush.bf16.msra.mxu0 0
    %1064 = vmatpush.bf16.msra.mxu0 0
    %1065 = vmatpush.bf16.msra.mxu0 0
    %1066 = vmatpush.bf16.msra.mxu0 0
    %1067 = vmatpush.bf16.msra.mxu0 %v1015
    %1068 = vmatmul.bf16.gmra.mxu0 %v1036
    %v1069 = vpop.f32.mrf.mxu0
    %v1070 = vadd.f32 %v1051, %v1069
    %v1071 = vpop.f32.mrf.mxu0
    %v1072 = vadd.f32 %v1053, %v1071
    %1073 = vmatmul.bf16.gmra.mxu0 %v1039
    %v1074 = vpop.f32.mrf.mxu0
    %v1075 = vadd.f32 %v1056, %v1074
    %v1076 = vpop.f32.mrf.mxu0
    %v1077 = vadd.f32 %v1058, %v1076
    %1078 = vdwg.mxu0
    %1079 = vmatpush.bf16.msra.mxu0 %v1014
    %1080 = vmatpush.bf16.msra.mxu0 %v1012
    %1081 = vmatpush.bf16.msra.mxu0 %v1010
    %1082 = vmatpush.bf16.msra.mxu0 %v1008
    %1083 = vmatpush.bf16.msra.mxu0 %v1006
    %1084 = vmatpush.bf16.msra.mxu0 %v1004
    %1085 = vmatpush.bf16.msra.mxu0 %v1002
    %1086 = vmatpush.bf16.msra.mxu0 %v1000
    %1087 = vmatmul.bf16.gmra.mxu0 %v939
    %v1088 = vpop.f32.mrf.mxu0
    %v1089 = vadd.f32 0.0, %v1088
    %v1090 = vpop.f32.mrf.mxu0
    %v1091 = vadd.f32 0.0, %v1090
    %1092 = vmatmul.bf16.gmra.mxu0 %v941
    %v1093 = vpop.f32.mrf.mxu0
    %v1094 = vadd.f32 0.0, %v1093
    %v1095 = vpop.f32.mrf.mxu0
    %v1096 = vadd.f32 0.0, %v1095
    %1097 = vdwg.mxu0
    %1098 = vmatpush.bf16.msra.mxu0 0
    %1099 = vmatpush.bf16.msra.mxu0 0
    %1100 = vmatpush.bf16.msra.mxu0 0
    %1101 = vmatpush.bf16.msra.mxu0 0
    %1102 = vmatpush.bf16.msra.mxu0 0
    %1103 = vmatpush.bf16.msra.mxu0 0
    %1104 = vmatpush.bf16.msra.mxu0 0
    %1105 = vmatpush.bf16.msra.mxu0 %v1016
    %1106 = vmatmul.bf16.gmra.mxu0 %v1036
    %v1107 = vpop.f32.mrf.mxu0
    %v1108 = vadd.f32 %v1089, %v1107
    %v1109 = vpop.f32.mrf.mxu0
    %v1110 = vadd.f32 %v1091, %v1109
    %1111 = vmatmul.bf16.gmra.mxu0 %v1039
    %v1112 = vpop.f32.mrf.mxu0
    %v1113 = vadd.f32 %v1094, %v1112
    %v1114 = vpop.f32.mrf.mxu0
    %v1115 = vadd.f32 %v1096, %v1114
    %1116 = vdwg.mxu0
    %v1121 = vunpack.c.l.b16 %v840
    %v1122 = vunpack.c.h.b16 %v840
    %v1123 = vunpack.c.l.b16 %v841
    %v1124 = vunpack.c.h.b16 %v841
    %v1125 = vunpack.c.l.b16 %v843
    %v1126 = vunpack.c.h.b16 %v843
    %v1127 = vunpack.c.l.b16 %v844
    %v1128 = vunpack.c.h.b16 %v844
    %v1129 = vpack.c.b16 %v1123, %v1121
    %v1130 = vpack.c.b16 %v1124, %v1122
    %v1131 = vpack.c.b16 %v1127, %v1125
    %v1132 = vpack.c.b16 %v1128, %v1126
    %v1153 = vunpack.c.l.b16 %v846
    %v1154 = vunpack.c.h.b16 %v846
    %v1155 = vunpack.c.l.b16 %v847
    %v1156 = vunpack.c.h.b16 %v847
    %v1157 = vunpack.c.l.b16 %v848
    %v1158 = vunpack.c.h.b16 %v848
    %v1159 = vunpack.c.l.b16 %v849
    %v1160 = vunpack.c.h.b16 %v849
    %v1161 = vunpack.c.l.b16 %v850
    %v1162 = vunpack.c.h.b16 %v850
    %v1163 = vunpack.c.l.b16 %v851
    %v1164 = vunpack.c.h.b16 %v851
    %v1165 = vunpack.c.l.b16 %v852
    %v1166 = vunpack.c.h.b16 %v852
    %v1167 = vunpack.c.l.b16 %v853
    %v1168 = vunpack.c.h.b16 %v853
    %v1169 = vunpack.c.l.b16 %v854
    %v1170 = vunpack.c.h.b16 %v854
    %v1171 = vunpack.c.l.b16 %v855
    %v1172 = vunpack.c.h.b16 %v855
    %v1173 = vunpack.c.l.b16 %v856
    %v1174 = vunpack.c.h.b16 %v856
    %v1175 = vunpack.c.l.b16 %v857
    %v1176 = vunpack.c.h.b16 %v857
    %v1177 = vunpack.c.l.b16 %v858
    %v1178 = vunpack.c.h.b16 %v858
    %v1179 = vunpack.c.l.b16 %v859
    %v1180 = vunpack.c.h.b16 %v859
    %v1181 = vunpack.c.l.b16 %v860
    %v1182 = vunpack.c.h.b16 %v860
    %v1183 = vunpack.c.l.b16 %v861
    %v1184 = vunpack.c.h.b16 %v861
    %v1185 = vunpack.c.l.b16 %v862
    %v1186 = vunpack.c.h.b16 %v862
    %v1187 = vunpack.c.l.b16 %v863
    %v1188 = vunpack.c.h.b16 %v863
    %v1189 = vpack.c.b16 %v1155, %v1153
    %v1190 = vpack.c.b16 %v1156, %v1154
    %v1191 = vpack.c.b16 %v1159, %v1157
    %v1192 = vpack.c.b16 %v1160, %v1158
    %v1193 = vpack.c.b16 %v1163, %v1161
    %v1194 = vpack.c.b16 %v1164, %v1162
    %v1195 = vpack.c.b16 %v1167, %v1165
    %v1196 = vpack.c.b16 %v1168, %v1166
    %v1197 = vpack.c.b16 %v1171, %v1169
    %v1198 = vpack.c.b16 %v1172, %v1170
    %v1199 = vpack.c.b16 %v1175, %v1173
    %v1200 = vpack.c.b16 %v1176, %v1174
    %v1201 = vpack.c.b16 %v1179, %v1177
    %v1202 = vpack.c.b16 %v1180, %v1178
    %v1203 = vpack.c.b16 %v1183, %v1181
    %v1204 = vpack.c.b16 %v1184, %v1182
    %v1205 = vpack.c.b16 %v1187, %v1185
    %v1206 = vpack.c.b16 %v1188, %v1186
    %v1226 = vsel %vm272, %v1130, 0
    %v1229 = vsel %vm272, %v1132, 0
    %1231 = vmatpush.bf16.msra.mxu0 %v1203
    %1232 = vmatpush.bf16.msra.mxu0 %v1201
    %1233 = vmatpush.bf16.msra.mxu0 %v1199
    %1234 = vmatpush.bf16.msra.mxu0 %v1197
    %1235 = vmatpush.bf16.msra.mxu0 %v1195
    %1236 = vmatpush.bf16.msra.mxu0 %v1193
    %1237 = vmatpush.bf16.msra.mxu0 %v1191
    %1238 = vmatpush.bf16.msra.mxu0 %v1189
    %1239 = vmatmul.bf16.gmra.mxu0 %v1129
    %v1240 = vpop.f32.mrf.mxu0
    %v1241 = vadd.f32 %v1070, %v1240
    %v1242 = vpop.f32.mrf.mxu0
    %v1243 = vadd.f32 %v1072, %v1242
    %1244 = vmatmul.bf16.gmra.mxu0 %v1131
    %v1245 = vpop.f32.mrf.mxu0
    %v1246 = vadd.f32 %v1075, %v1245
    %v1247 = vpop.f32.mrf.mxu0
    %v1248 = vadd.f32 %v1077, %v1247
    %1249 = vdwg.mxu0
    %1250 = vmatpush.bf16.msra.mxu0 0
    %1251 = vmatpush.bf16.msra.mxu0 0
    %1252 = vmatpush.bf16.msra.mxu0 0
    %1253 = vmatpush.bf16.msra.mxu0 0
    %1254 = vmatpush.bf16.msra.mxu0 0
    %1255 = vmatpush.bf16.msra.mxu0 0
    %1256 = vmatpush.bf16.msra.mxu0 0
    %1257 = vmatpush.bf16.msra.mxu0 %v1205
    %1258 = vmatmul.bf16.gmra.mxu0 %v1226
    %v1259 = vpop.f32.mrf.mxu0
    %v1260 = vadd.f32 %v1241, %v1259
    %v1261 = vpop.f32.mrf.mxu0
    %v1262 = vadd.f32 %v1243, %v1261
    %1263 = vmatmul.bf16.gmra.mxu0 %v1229
    %v1264 = vpop.f32.mrf.mxu0
    %v1265 = vadd.f32 %v1246, %v1264
    %v1266 = vpop.f32.mrf.mxu0
    %v1267 = vadd.f32 %v1248, %v1266
    %1268 = vdwg.mxu0
    %1269 = vmatpush.bf16.msra.mxu0 %v1204
    %1270 = vmatpush.bf16.msra.mxu0 %v1202
    %1271 = vmatpush.bf16.msra.mxu0 %v1200
    %1272 = vmatpush.bf16.msra.mxu0 %v1198
    %1273 = vmatpush.bf16.msra.mxu0 %v1196
    %1274 = vmatpush.bf16.msra.mxu0 %v1194
    %1275 = vmatpush.bf16.msra.mxu0 %v1192
    %1276 = vmatpush.bf16.msra.mxu0 %v1190
    %1277 = vmatmul.bf16.gmra.mxu0 %v1129
    %v1278 = vpop.f32.mrf.mxu0
    %v1279 = vadd.f32 %v1108, %v1278
    %v1280 = vpop.f32.mrf.mxu0
    %v1281 = vadd.f32 %v1110, %v1280
    %1282 = vmatmul.bf16.gmra.mxu0 %v1131
    %v1283 = vpop.f32.mrf.mxu0
    %v1284 = vadd.f32 %v1113, %v1283
    %v1285 = vpop.f32.mrf.mxu0
    %v1286 = vadd.f32 %v1115, %v1285
    %1287 = vdwg.mxu0
    %1288 = vmatpush.bf16.msra.mxu0 0
    %1289 = vmatpush.bf16.msra.mxu0 0
    %1290 = vmatpush.bf16.msra.mxu0 0
    %1291 = vmatpush.bf16.msra.mxu0 0
    %1292 = vmatpush.bf16.msra.mxu0 0
    %1293 = vmatpush.bf16.msra.mxu0 0
    %1294 = vmatpush.bf16.msra.mxu0 0
    %1295 = vmatpush.bf16.msra.mxu0 %v1206
    %1296 = vmatmul.bf16.gmra.mxu0 %v1226
    %v1297 = vpop.f32.mrf.mxu0
    %v1298 = vadd.f32 %v1279, %v1297
    %v1299 = vpop.f32.mrf.mxu0
    %v1300 = vadd.f32 %v1281, %v1299
    %1301 = vmatmul.bf16.gmra.mxu0 %v1229
    %v1302 = vpop.f32.mrf.mxu0
    %v1303 = vadd.f32 %v1284, %v1302
    %v1304 = vpop.f32.mrf.mxu0
    %v1305 = vadd.f32 %v1286, %v1304
    %1306 = vdwg.mxu0
    %v1309 = vrot.slane %v840, 5
    %v1310 = vrot.slane %v1309, 4
    %v1311 = vrot.slane %v841, 5
    %v1312 = vsel %vm549, %v1310, %v1311
    %v1313 = vrot.slane %v1311, 4
    %v1314 = vrot.slane %v842, 5
    %v1315 = vsel %vm549, %v1313, %v1314
    %v1316 = vrot.slane %v843, 5
    %v1317 = vrot.slane %v1316, 4
    %v1318 = vrot.slane %v844, 5
    %v1319 = vsel %vm549, %v1317, %v1318
    %v1320 = vrot.slane %v1318, 4
    %v1321 = vrot.slane %v845, 5
    %v1322 = vsel %vm549, %v1320, %v1321
    %s1323 = scalar_lea.vmem [#allocation4], 288
    %v1324 = vld [vmem:[%s1323] sm:$0xff]
    %v1325 = vld [vmem:[%s1323 + $0x8] sm:$0xff]
    %v1326 = vld [vmem:[%s1323 + $0x10] sm:$0xff]
    %v1327 = vld [vmem:[%s1323 + $0x18] sm:$0xff]
    %v1328 = vld [vmem:[%s1323 + $0x20] sm:$0xff]
    %v1329 = vld [vmem:[%s1323 + $0x28] sm:$0xff]
    %v1330 = vld [vmem:[%s1323 + $0x30] sm:$0xff]
    %v1331 = vld [vmem:[%s1323 + $0x38] sm:$0xff]
    %v1332 = vld [vmem:[%s1323 + $0x40] sm:$0xff]
    %v1333 = vld [vmem:[%s1323 + $0x48] sm:$0xff]
    %v1334 = vld [vmem:[%s1323 + $0x50] sm:$0xff]
    %v1335 = vld [vmem:[%s1323 + $0x58] sm:$0xff]
    %v1336 = vld [vmem:[%s1323 + $0x60] sm:$0xff]
    %v1337 = vld [vmem:[%s1323 + $0x68] sm:$0xff]
    %v1338 = vld [vmem:[%s1323 + $0x70] sm:$0xff]
    %v1339 = vld [vmem:[%s1323 + $0x78] sm:$0xff]
    %v1340 = vld [vmem:[%s1323 + $0x80] sm:$0xff]
    %v1341 = vld [vmem:[%s1323 + $0x88] sm:$0xff]
    %v1342 = vunpack.c.l.b16 %v1312
    %v1343 = vunpack.c.h.b16 %v1312
    %v1344 = vunpack.c.l.b16 %v1315
    %v1345 = vunpack.c.h.b16 %v1315
    %v1346 = vunpack.c.l.b16 %v1319
    %v1347 = vunpack.c.h.b16 %v1319
    %v1348 = vunpack.c.l.b16 %v1322
    %v1349 = vunpack.c.h.b16 %v1322
    %v1350 = vpack.c.b16 %v1344, %v1342
    %v1351 = vpack.c.b16 %v1345, %v1343
    %v1352 = vpack.c.b16 %v1348, %v1346
    %v1353 = vpack.c.b16 %v1349, %v1347
    %v1374 = vunpack.c.l.b16 %v1324
    %v1375 = vunpack.c.h.b16 %v1324
    %v1376 = vunpack.c.l.b16 %v1325
    %v1377 = vunpack.c.h.b16 %v1325
    %v1378 = vunpack.c.l.b16 %v1326
    %v1379 = vunpack.c.h.b16 %v1326
    %v1380 = vunpack.c.l.b16 %v1327
    %v1381 = vunpack.c.h.b16 %v1327
    %v1382 = vunpack.c.l.b16 %v1328
    %v1383 = vunpack.c.h.b16 %v1328
    %v1384 = vunpack.c.l.b16 %v1329
    %v1385 = vunpack.c.h.b16 %v1329
    %v1386 = vunpack.c.l.b16 %v1330
    %v1387 = vunpack.c.h.b16 %v1330
    %v1388 = vunpack.c.l.b16 %v1331
    %v1389 = vunpack.c.h.b16 %v1331
    %v1390 = vunpack.c.l.b16 %v1332
    %v1391 = vunpack.c.h.b16 %v1332
    %v1392 = vunpack.c.l.b16 %v1333
    %v1393 = vunpack.c.h.b16 %v1333
    %v1394 = vunpack.c.l.b16 %v1334
    %v1395 = vunpack.c.h.b16 %v1334
    %v1396 = vunpack.c.l.b16 %v1335
    %v1397 = vunpack.c.h.b16 %v1335
    %v1398 = vunpack.c.l.b16 %v1336
    %v1399 = vunpack.c.h.b16 %v1336
    %v1400 = vunpack.c.l.b16 %v1337
    %v1401 = vunpack.c.h.b16 %v1337
    %v1402 = vunpack.c.l.b16 %v1338
    %v1403 = vunpack.c.h.b16 %v1338
    %v1404 = vunpack.c.l.b16 %v1339
    %v1405 = vunpack.c.h.b16 %v1339
    %v1406 = vunpack.c.l.b16 %v1340
    %v1407 = vunpack.c.h.b16 %v1340
    %v1408 = vunpack.c.l.b16 %v1341
    %v1409 = vunpack.c.h.b16 %v1341
    %v1410 = vpack.c.b16 %v1376, %v1374
    %v1411 = vpack.c.b16 %v1377, %v1375
    %v1412 = vpack.c.b16 %v1380, %v1378
    %v1413 = vpack.c.b16 %v1381, %v1379
    %v1414 = vpack.c.b16 %v1384, %v1382
    %v1415 = vpack.c.b16 %v1385, %v1383
    %v1416 = vpack.c.b16 %v1388, %v1386
    %v1417 = vpack.c.b16 %v1389, %v1387
    %v1418 = vpack.c.b16 %v1392, %v1390
    %v1419 = vpack.c.b16 %v1393, %v1391
    %v1420 = vpack.c.b16 %v1396, %v1394
    %v1421 = vpack.c.b16 %v1397, %v1395
    %v1422 = vpack.c.b16 %v1400, %v1398
    %v1423 = vpack.c.b16 %v1401, %v1399
    %v1424 = vpack.c.b16 %v1404, %v1402
    %v1425 = vpack.c.b16 %v1405, %v1403
    %v1426 = vpack.c.b16 %v1408, %v1406
    %v1427 = vpack.c.b16 %v1409, %v1407
    %v1447 = vsel %vm272, %v1351, 0
    %v1450 = vsel %vm272, %v1353, 0
    %1452 = vmatpush.bf16.msra.mxu0 %v1424
    %1453 = vmatpush.bf16.msra.mxu0 %v1422
    %1454 = vmatpush.bf16.msra.mxu0 %v1420
    %1455 = vmatpush.bf16.msra.mxu0 %v1418
    %1456 = vmatpush.bf16.msra.mxu0 %v1416
    %1457 = vmatpush.bf16.msra.mxu0 %v1414
    %1458 = vmatpush.bf16.msra.mxu0 %v1412
    %1459 = vmatpush.bf16.msra.mxu0 %v1410
    %1460 = vmatmul.bf16.gmra.mxu0 %v1350
    %v1461 = vpop.f32.mrf.mxu0
    %v1462 = vadd.f32 0.0, %v1461
    %v1463 = vpop.f32.mrf.mxu0
    %v1464 = vadd.f32 0.0, %v1463
    %1465 = vmatmul.bf16.gmra.mxu0 %v1352
    %v1466 = vpop.f32.mrf.mxu0
    %v1467 = vadd.f32 0.0, %v1466
    %v1468 = vpop.f32.mrf.mxu0
    %v1469 = vadd.f32 0.0, %v1468
    %1470 = vdwg.mxu0
    %1471 = vmatpush.bf16.msra.mxu0 0
    %1472 = vmatpush.bf16.msra.mxu0 0
    %1473 = vmatpush.bf16.msra.mxu0 0
    %1474 = vmatpush.bf16.msra.mxu0 0
    %1475 = vmatpush.bf16.msra.mxu0 0
    %1476 = vmatpush.bf16.msra.mxu0 0
    %1477 = vmatpush.bf16.msra.mxu0 0
    %1478 = vmatpush.bf16.msra.mxu0 %v1426
    %1479 = vmatmul.bf16.gmra.mxu0 %v1447
    %v1480 = vpop.f32.mrf.mxu0
    %v1481 = vadd.f32 %v1462, %v1480
    %v1482 = vpop.f32.mrf.mxu0
    %v1483 = vadd.f32 %v1464, %v1482
    %1484 = vmatmul.bf16.gmra.mxu0 %v1450
    %v1485 = vpop.f32.mrf.mxu0
    %v1486 = vadd.f32 %v1467, %v1485
    %v1487 = vpop.f32.mrf.mxu0
    %v1488 = vadd.f32 %v1469, %v1487
    %1489 = vdwg.mxu0
    %1490 = vmatpush.bf16.msra.mxu0 %v1425
    %1491 = vmatpush.bf16.msra.mxu0 %v1423
    %1492 = vmatpush.bf16.msra.mxu0 %v1421
    %1493 = vmatpush.bf16.msra.mxu0 %v1419
    %1494 = vmatpush.bf16.msra.mxu0 %v1417
    %1495 = vmatpush.bf16.msra.mxu0 %v1415
    %1496 = vmatpush.bf16.msra.mxu0 %v1413
    %1497 = vmatpush.bf16.msra.mxu0 %v1411
    %1498 = vmatmul.bf16.gmra.mxu0 %v1350
    %v1499 = vpop.f32.mrf.mxu0
    %v1500 = vadd.f32 0.0, %v1499
    %v1501 = vpop.f32.mrf.mxu0
    %v1502 = vadd.f32 0.0, %v1501
    %1503 = vmatmul.bf16.gmra.mxu0 %v1352
    %v1504 = vpop.f32.mrf.mxu0
    %v1505 = vadd.f32 0.0, %v1504
    %v1506 = vpop.f32.mrf.mxu0
    %v1507 = vadd.f32 0.0, %v1506
    %1508 = vdwg.mxu0
    %1509 = vmatpush.bf16.msra.mxu0 0
    %1510 = vmatpush.bf16.msra.mxu0 0
    %1511 = vmatpush.bf16.msra.mxu0 0
    %1512 = vmatpush.bf16.msra.mxu0 0
    %1513 = vmatpush.bf16.msra.mxu0 0
    %1514 = vmatpush.bf16.msra.mxu0 0
    %1515 = vmatpush.bf16.msra.mxu0 0
    %1516 = vmatpush.bf16.msra.mxu0 %v1427
    %1517 = vmatmul.bf16.gmra.mxu0 %v1447
    %v1518 = vpop.f32.mrf.mxu0
    %v1519 = vadd.f32 %v1500, %v1518
    %v1520 = vpop.f32.mrf.mxu0
    %v1521 = vadd.f32 %v1502, %v1520
    %1522 = vmatmul.bf16.gmra.mxu0 %v1450
    %v1523 = vpop.f32.mrf.mxu0
    %v1524 = vadd.f32 %v1505, %v1523
    %v1525 = vpop.f32.mrf.mxu0
    %v1526 = vadd.f32 %v1507, %v1525
    %1527 = vdwg.mxu0
    %v1528 = vadd.f32 %v1260, %v1481
    %v1529 = vadd.f32 %v1298, %v1519
    %v1530 = vadd.f32 %v1262, %v1483
    %v1531 = vadd.f32 %v1300, %v1521
    %v1532 = vadd.f32 %v1265, %v1486
    %v1533 = vadd.f32 %v1303, %v1524
    %v1534 = vadd.f32 %v1267, %v1488
    %v1535 = vadd.f32 %v1305, %v1526
    %v1536 = vld [vmem:[%s4] sm:$0x3]
    %v1538 = vperm.slane %v1536, 0
    %v1539 = vperm.slane %v1536, 1
    %v1542 = vadd.f32 %v1528, %v1538
    %v1543 = vadd.f32 %v1529, %v1539
    %v1544 = vadd.f32 %v1530, %v1538
    %v1545 = vadd.f32 %v1531, %v1539
    %v1546 = vadd.f32 %v1532, %v1538
    %v1547 = vadd.f32 %v1533, %v1539
    %v1548 = vadd.f32 %v1534, %v1538
    %v1549 = vadd.f32 %v1535, %v1539
    %v1550 = vmax.f32 %v1542, 0.0
    %v1551 = vmax.f32 %v1543, 0.0
    %v1552 = vmax.f32 %v1544, 0.0
    %v1553 = vmax.f32 %v1545, 0.0
    %v1554 = vmax.f32 %v1546, 0.0
    %v1555 = vmax.f32 %v1547, 0.0
    %v1556 = vmax.f32 %v1548, 0.0
    %v1557 = vmax.f32 %v1549, 0.0
    %v1558 = vld [vmem:[#allocation6] sm:$0xff]
    %v1559 = vld [vmem:[#allocation6 + $0x8] sm:$0xff]
    %v1560 = vld [vmem:[#allocation6 + $0x10] sm:$0xff]
    %v1561 = vld [vmem:[#allocation6 + $0x18] sm:$0xff]
    %v1562 = vld [vmem:[#allocation6 + $0x20] sm:$0xff]
    %v1563 = vld [vmem:[#allocation6 + $0x28] sm:$0xff]
    %v1564 = vld [vmem:[#allocation6 + $0x30] sm:$0xff]
    %v1565 = vld [vmem:[#allocation6 + $0x38] sm:$0xff]
    %v1566 = vld [vmem:[#allocation6 + $0x40] sm:$0xff]
    %v1567 = vld [vmem:[#allocation6 + $0x48] sm:$0xff]
    %v1568 = vld [vmem:[#allocation6 + $0x50] sm:$0xff]
    %v1569 = vld [vmem:[#allocation6 + $0x58] sm:$0xff]
    %v1570 = vld [vmem:[#allocation6 + $0x60] sm:$0xff]
    %v1571 = vld [vmem:[#allocation6 + $0x68] sm:$0xff]
    %v1572 = vld [vmem:[#allocation6 + $0x70] sm:$0xff]
    %v1573 = vld [vmem:[#allocation6 + $0x78] sm:$0xff]
    %v1574 = vld [vmem:[#allocation6 + $0x80] sm:$0xff]
    %v1575 = vld [vmem:[#allocation6 + $0x88] sm:$0xff]
    %s1576 = scalar_lea.vmem [#allocation6], 144
    %v1577 = vld [vmem:[%s1576] sm:$0xff]
    %v1578 = vld [vmem:[%s1576 + $0x8] sm:$0xff]
    %v1579 = vld [vmem:[%s1576 + $0x10] sm:$0xff]
    %v1580 = vld [vmem:[%s1576 + $0x18] sm:$0xff]
    %v1581 = vld [vmem:[%s1576 + $0x20] sm:$0xff]
    %v1582 = vld [vmem:[%s1576 + $0x28] sm:$0xff]
    %v1583 = vld [vmem:[%s1576 + $0x30] sm:$0xff]
    %v1584 = vld [vmem:[%s1576 + $0x38] sm:$0xff]
    %v1585 = vld [vmem:[%s1576 + $0x40] sm:$0xff]
    %v1586 = vld [vmem:[%s1576 + $0x48] sm:$0xff]
    %v1587 = vld [vmem:[%s1576 + $0x50] sm:$0xff]
    %v1588 = vld [vmem:[%s1576 + $0x58] sm:$0xff]
    %v1589 = vld [vmem:[%s1576 + $0x60] sm:$0xff]
    %v1590 = vld [vmem:[%s1576 + $0x68] sm:$0xff]
    %v1591 = vld [vmem:[%s1576 + $0x70] sm:$0xff]
    %v1592 = vld [vmem:[%s1576 + $0x78] sm:$0xff]
    %v1593 = vld [vmem:[%s1576 + $0x80] sm:$0xff]
    %v1594 = vld [vmem:[%s1576 + $0x88] sm:$0xff]
    %v1613 = vunpack.c.l.b16 %v1577
    %v1614 = vunpack.c.h.b16 %v1577
    %v1615 = vunpack.c.l.b16 %v1578
    %v1616 = vunpack.c.h.b16 %v1578
    %v1617 = vunpack.c.l.b16 %v1579
    %v1618 = vunpack.c.h.b16 %v1579
    %v1619 = vunpack.c.l.b16 %v1580
    %v1620 = vunpack.c.h.b16 %v1580
    %v1621 = vunpack.c.l.b16 %v1581
    %v1622 = vunpack.c.h.b16 %v1581
    %v1623 = vunpack.c.l.b16 %v1582
    %v1624 = vunpack.c.h.b16 %v1582
    %v1625 = vunpack.c.l.b16 %v1583
    %v1626 = vunpack.c.h.b16 %v1583
    %v1627 = vunpack.c.l.b16 %v1584
    %v1628 = vunpack.c.h.b16 %v1584
    %v1629 = vunpack.c.l.b16 %v1585
    %v1630 = vunpack.c.h.b16 %v1585
    %v1631 = vunpack.c.l.b16 %v1586
    %v1632 = vunpack.c.h.b16 %v1586
    %v1633 = vunpack.c.l.b16 %v1587
    %v1634 = vunpack.c.h.b16 %v1587
    %v1635 = vunpack.c.l.b16 %v1588
    %v1636 = vunpack.c.h.b16 %v1588
    %v1637 = vunpack.c.l.b16 %v1589
    %v1638 = vunpack.c.h.b16 %v1589
    %v1639 = vunpack.c.l.b16 %v1590
    %v1640 = vunpack.c.h.b16 %v1590
    %v1641 = vunpack.c.l.b16 %v1591
    %v1642 = vunpack.c.h.b16 %v1591
    %v1643 = vunpack.c.l.b16 %v1592
    %v1644 = vunpack.c.h.b16 %v1592
    %v1645 = vunpack.c.l.b16 %v1593
    %v1646 = vunpack.c.h.b16 %v1593
    %v1647 = vunpack.c.l.b16 %v1594
    %v1648 = vunpack.c.h.b16 %v1594
    %v1649 = vpack.c.b16 %v1615, %v1613
    %v1650 = vpack.c.b16 %v1616, %v1614
    %v1651 = vpack.c.b16 %v1619, %v1617
    %v1652 = vpack.c.b16 %v1620, %v1618
    %v1653 = vpack.c.b16 %v1623, %v1621
    %v1654 = vpack.c.b16 %v1624, %v1622
    %v1655 = vpack.c.b16 %v1627, %v1625
    %v1656 = vpack.c.b16 %v1628, %v1626
    %v1657 = vpack.c.b16 %v1631, %v1629
    %v1658 = vpack.c.b16 %v1632, %v1630
    %v1659 = vpack.c.b16 %v1635, %v1633
    %v1660 = vpack.c.b16 %v1636, %v1634
    %v1661 = vpack.c.b16 %v1639, %v1637
    %v1662 = vpack.c.b16 %v1640, %v1638
    %v1663 = vpack.c.b16 %v1643, %v1641
    %v1664 = vpack.c.b16 %v1644, %v1642
    %v1665 = vpack.c.b16 %v1647, %v1645
    %v1666 = vpack.c.b16 %v1648, %v1646
    %1685 = vmatpush.bf16.msra.mxu0 %v1663
    %1686 = vmatpush.bf16.msra.mxu0 %v1661
    %1687 = vmatpush.bf16.msra.mxu0 %v1659
    %1688 = vmatpush.bf16.msra.mxu0 %v1657
    %1689 = vmatpush.bf16.msra.mxu0 %v1655
    %1690 = vmatpush.bf16.msra.mxu0 %v1653
    %1691 = vmatpush.bf16.msra.mxu0 %v1651
    %1692 = vmatpush.bf16.msra.mxu0 %v1649
    %1693 = vmatmul.bf16.gmra.mxu0 %v176
    %v1694 = vpop.f32.mrf.mxu0
    %v1695 = vadd.f32 0.0, %v1694
    %v1696 = vpop.f32.mrf.mxu0
    %v1697 = vadd.f32 0.0, %v1696
    %1698 = vmatmul.bf16.gmra.mxu0 %v178
    %v1699 = vpop.f32.mrf.mxu0
    %v1700 = vadd.f32 0.0, %v1699
    %v1701 = vpop.f32.mrf.mxu0
    %v1702 = vadd.f32 0.0, %v1701
    %1703 = vdwg.mxu0
    %1704 = vmatpush.bf16.msra.mxu0 0
    %1705 = vmatpush.bf16.msra.mxu0 0
    %1706 = vmatpush.bf16.msra.mxu0 0
    %1707 = vmatpush.bf16.msra.mxu0 0
    %1708 = vmatpush.bf16.msra.mxu0 0
    %1709 = vmatpush.bf16.msra.mxu0 0
    %1710 = vmatpush.bf16.msra.mxu0 0
    %1711 = vmatpush.bf16.msra.mxu0 %v1665
    %1712 = vmatmul.bf16.gmra.mxu0 %v274
    %v1713 = vpop.f32.mrf.mxu0
    %v1714 = vadd.f32 %v1695, %v1713
    %v1715 = vpop.f32.mrf.mxu0
    %v1716 = vadd.f32 %v1697, %v1715
    %1717 = vmatmul.bf16.gmra.mxu0 %v277
    %v1718 = vpop.f32.mrf.mxu0
    %v1719 = vadd.f32 %v1700, %v1718
    %v1720 = vpop.f32.mrf.mxu0
    %v1721 = vadd.f32 %v1702, %v1720
    %1722 = vdwg.mxu0
    %1723 = vmatpush.bf16.msra.mxu0 %v1664
    %1724 = vmatpush.bf16.msra.mxu0 %v1662
    %1725 = vmatpush.bf16.msra.mxu0 %v1660
    %1726 = vmatpush.bf16.msra.mxu0 %v1658
    %1727 = vmatpush.bf16.msra.mxu0 %v1656
    %1728 = vmatpush.bf16.msra.mxu0 %v1654
    %1729 = vmatpush.bf16.msra.mxu0 %v1652
    %1730 = vmatpush.bf16.msra.mxu0 %v1650
    %1731 = vmatmul.bf16.gmra.mxu0 %v176
    %v1732 = vpop.f32.mrf.mxu0
    %v1733 = vadd.f32 0.0, %v1732
    %v1734 = vpop.f32.mrf.mxu0
    %v1735 = vadd.f32 0.0, %v1734
    %1736 = vmatmul.bf16.gmra.mxu0 %v178
    %v1737 = vpop.f32.mrf.mxu0
    %v1738 = vadd.f32 0.0, %v1737
    %v1739 = vpop.f32.mrf.mxu0
    %v1740 = vadd.f32 0.0, %v1739
    %1741 = vdwg.mxu0
    %1742 = vmatpush.bf16.msra.mxu0 0
    %1743 = vmatpush.bf16.msra.mxu0 0
    %1744 = vmatpush.bf16.msra.mxu0 0
    %1745 = vmatpush.bf16.msra.mxu0 0
    %1746 = vmatpush.bf16.msra.mxu0 0
    %1747 = vmatpush.bf16.msra.mxu0 0
    %1748 = vmatpush.bf16.msra.mxu0 0
    %1749 = vmatpush.bf16.msra.mxu0 %v1666
    %1750 = vmatmul.bf16.gmra.mxu0 %v274
    %v1751 = vpop.f32.mrf.mxu0
    %v1752 = vadd.f32 %v1733, %v1751
    %v1753 = vpop.f32.mrf.mxu0
    %v1754 = vadd.f32 %v1735, %v1753
    %1755 = vmatmul.bf16.gmra.mxu0 %v277
    %v1756 = vpop.f32.mrf.mxu0
    %v1757 = vadd.f32 %v1738, %v1756
    %v1758 = vpop.f32.mrf.mxu0
    %v1759 = vadd.f32 %v1740, %v1758
    %1760 = vdwg.mxu0
    %v1779 = vunpack.c.l.b16 %v1558
    %v1780 = vunpack.c.h.b16 %v1558
    %v1781 = vunpack.c.l.b16 %v1559
    %v1782 = vunpack.c.h.b16 %v1559
    %v1783 = vunpack.c.l.b16 %v1560
    %v1784 = vunpack.c.h.b16 %v1560
    %v1785 = vunpack.c.l.b16 %v1561
    %v1786 = vunpack.c.h.b16 %v1561
    %v1787 = vunpack.c.l.b16 %v1562
    %v1788 = vunpack.c.h.b16 %v1562
    %v1789 = vunpack.c.l.b16 %v1563
    %v1790 = vunpack.c.h.b16 %v1563
    %v1791 = vunpack.c.l.b16 %v1564
    %v1792 = vunpack.c.h.b16 %v1564
    %v1793 = vunpack.c.l.b16 %v1565
    %v1794 = vunpack.c.h.b16 %v1565
    %v1795 = vunpack.c.l.b16 %v1566
    %v1796 = vunpack.c.h.b16 %v1566
    %v1797 = vunpack.c.l.b16 %v1567
    %v1798 = vunpack.c.h.b16 %v1567
    %v1799 = vunpack.c.l.b16 %v1568
    %v1800 = vunpack.c.h.b16 %v1568
    %v1801 = vunpack.c.l.b16 %v1569
    %v1802 = vunpack.c.h.b16 %v1569
    %v1803 = vunpack.c.l.b16 %v1570
    %v1804 = vunpack.c.h.b16 %v1570
    %v1805 = vunpack.c.l.b16 %v1571
    %v1806 = vunpack.c.h.b16 %v1571
    %v1807 = vunpack.c.l.b16 %v1572
    %v1808 = vunpack.c.h.b16 %v1572
    %v1809 = vunpack.c.l.b16 %v1573
    %v1810 = vunpack.c.h.b16 %v1573
    %v1811 = vunpack.c.l.b16 %v1574
    %v1812 = vunpack.c.h.b16 %v1574
    %v1813 = vunpack.c.l.b16 %v1575
    %v1814 = vunpack.c.h.b16 %v1575
    %v1815 = vpack.c.b16 %v1781, %v1779
    %v1816 = vpack.c.b16 %v1782, %v1780
    %v1817 = vpack.c.b16 %v1785, %v1783
    %v1818 = vpack.c.b16 %v1786, %v1784
    %v1819 = vpack.c.b16 %v1789, %v1787
    %v1820 = vpack.c.b16 %v1790, %v1788
    %v1821 = vpack.c.b16 %v1793, %v1791
    %v1822 = vpack.c.b16 %v1794, %v1792
    %v1823 = vpack.c.b16 %v1797, %v1795
    %v1824 = vpack.c.b16 %v1798, %v1796
    %v1825 = vpack.c.b16 %v1801, %v1799
    %v1826 = vpack.c.b16 %v1802, %v1800
    %v1827 = vpack.c.b16 %v1805, %v1803
    %v1828 = vpack.c.b16 %v1806, %v1804
    %v1829 = vpack.c.b16 %v1809, %v1807
    %v1830 = vpack.c.b16 %v1810, %v1808
    %v1831 = vpack.c.b16 %v1813, %v1811
    %v1832 = vpack.c.b16 %v1814, %v1812
    %1851 = vmatpush.bf16.msra.mxu0 %v1829
    %1852 = vmatpush.bf16.msra.mxu0 %v1827
    %1853 = vmatpush.bf16.msra.mxu0 %v1825
    %1854 = vmatpush.bf16.msra.mxu0 %v1823
    %1855 = vmatpush.bf16.msra.mxu0 %v1821
    %1856 = vmatpush.bf16.msra.mxu0 %v1819
    %1857 = vmatpush.bf16.msra.mxu0 %v1817
    %1858 = vmatpush.bf16.msra.mxu0 %v1815
    %1859 = vmatmul.bf16.gmra.mxu0 %v367
    %v1860 = vpop.f32.mrf.mxu0
    %v1861 = vadd.f32 %v1714, %v1860
    %v1862 = vpop.f32.mrf.mxu0
    %v1863 = vadd.f32 %v1716, %v1862
    %1864 = vmatmul.bf16.gmra.mxu0 %v369
    %v1865 = vpop.f32.mrf.mxu0
    %v1866 = vadd.f32 %v1719, %v1865
    %v1867 = vpop.f32.mrf.mxu0
    %v1868 = vadd.f32 %v1721, %v1867
    %1869 = vdwg.mxu0
    %1870 = vmatpush.bf16.msra.mxu0 0
    %1871 = vmatpush.bf16.msra.mxu0 0
    %1872 = vmatpush.bf16.msra.mxu0 0
    %1873 = vmatpush.bf16.msra.mxu0 0
    %1874 = vmatpush.bf16.msra.mxu0 0
    %1875 = vmatpush.bf16.msra.mxu0 0
    %1876 = vmatpush.bf16.msra.mxu0 0
    %1877 = vmatpush.bf16.msra.mxu0 %v1831
    %1878 = vmatmul.bf16.gmra.mxu0 %v464
    %v1879 = vpop.f32.mrf.mxu0
    %v1880 = vadd.f32 %v1861, %v1879
    %v1881 = vpop.f32.mrf.mxu0
    %v1882 = vadd.f32 %v1863, %v1881
    %1883 = vmatmul.bf16.gmra.mxu0 %v467
    %v1884 = vpop.f32.mrf.mxu0
    %v1885 = vadd.f32 %v1866, %v1884
    %v1886 = vpop.f32.mrf.mxu0
    %v1887 = vadd.f32 %v1868, %v1886
    %1888 = vdwg.mxu0
    %1889 = vmatpush.bf16.msra.mxu0 %v1830
    %1890 = vmatpush.bf16.msra.mxu0 %v1828
    %1891 = vmatpush.bf16.msra.mxu0 %v1826
    %1892 = vmatpush.bf16.msra.mxu0 %v1824
    %1893 = vmatpush.bf16.msra.mxu0 %v1822
    %1894 = vmatpush.bf16.msra.mxu0 %v1820
    %1895 = vmatpush.bf16.msra.mxu0 %v1818
    %1896 = vmatpush.bf16.msra.mxu0 %v1816
    %1897 = vmatmul.bf16.gmra.mxu0 %v367
    %v1898 = vpop.f32.mrf.mxu0
    %v1899 = vadd.f32 %v1752, %v1898
    %v1900 = vpop.f32.mrf.mxu0
    %v1901 = vadd.f32 %v1754, %v1900
    %1902 = vmatmul.bf16.gmra.mxu0 %v369
    %v1903 = vpop.f32.mrf.mxu0
    %v1904 = vadd.f32 %v1757, %v1903
    %v1905 = vpop.f32.mrf.mxu0
    %v1906 = vadd.f32 %v1759, %v1905
    %1907 = vdwg.mxu0
    %1908 = vmatpush.bf16.msra.mxu0 0
    %1909 = vmatpush.bf16.msra.mxu0 0
    %1910 = vmatpush.bf16.msra.mxu0 0
    %1911 = vmatpush.bf16.msra.mxu0 0
    %1912 = vmatpush.bf16.msra.mxu0 0
    %1913 = vmatpush.bf16.msra.mxu0 0
    %1914 = vmatpush.bf16.msra.mxu0 0
    %1915 = vmatpush.bf16.msra.mxu0 %v1832
    %1916 = vmatmul.bf16.gmra.mxu0 %v464
    %v1917 = vpop.f32.mrf.mxu0
    %v1918 = vadd.f32 %v1899, %v1917
    %v1919 = vpop.f32.mrf.mxu0
    %v1920 = vadd.f32 %v1901, %v1919
    %1921 = vmatmul.bf16.gmra.mxu0 %v467
    %v1922 = vpop.f32.mrf.mxu0
    %v1923 = vadd.f32 %v1904, %v1922
    %v1924 = vpop.f32.mrf.mxu0
    %v1925 = vadd.f32 %v1906, %v1924
    %1926 = vdwg.mxu0
    %s1927 = scalar_lea.vmem [#allocation6], 288
    %v1928 = vld [vmem:[%s1927] sm:$0xff]
    %v1929 = vld [vmem:[%s1927 + $0x8] sm:$0xff]
    %v1930 = vld [vmem:[%s1927 + $0x10] sm:$0xff]
    %v1931 = vld [vmem:[%s1927 + $0x18] sm:$0xff]
    %v1932 = vld [vmem:[%s1927 + $0x20] sm:$0xff]
    %v1933 = vld [vmem:[%s1927 + $0x28] sm:$0xff]
    %v1934 = vld [vmem:[%s1927 + $0x30] sm:$0xff]
    %v1935 = vld [vmem:[%s1927 + $0x38] sm:$0xff]
    %v1936 = vld [vmem:[%s1927 + $0x40] sm:$0xff]
    %v1937 = vld [vmem:[%s1927 + $0x48] sm:$0xff]
    %v1938 = vld [vmem:[%s1927 + $0x50] sm:$0xff]
    %v1939 = vld [vmem:[%s1927 + $0x58] sm:$0xff]
    %v1940 = vld [vmem:[%s1927 + $0x60] sm:$0xff]
    %v1941 = vld [vmem:[%s1927 + $0x68] sm:$0xff]
    %v1942 = vld [vmem:[%s1927 + $0x70] sm:$0xff]
    %v1943 = vld [vmem:[%s1927 + $0x78] sm:$0xff]
    %v1944 = vld [vmem:[%s1927 + $0x80] sm:$0xff]
    %v1945 = vld [vmem:[%s1927 + $0x88] sm:$0xff]
    %v1964 = vunpack.c.l.b16 %v1928
    %v1965 = vunpack.c.h.b16 %v1928
    %v1966 = vunpack.c.l.b16 %v1929
    %v1967 = vunpack.c.h.b16 %v1929
    %v1968 = vunpack.c.l.b16 %v1930
    %v1969 = vunpack.c.h.b16 %v1930
    %v1970 = vunpack.c.l.b16 %v1931
    %v1971 = vunpack.c.h.b16 %v1931
    %v1972 = vunpack.c.l.b16 %v1932
    %v1973 = vunpack.c.h.b16 %v1932
    %v1974 = vunpack.c.l.b16 %v1933
    %v1975 = vunpack.c.h.b16 %v1933
    %v1976 = vunpack.c.l.b16 %v1934
    %v1977 = vunpack.c.h.b16 %v1934
    %v1978 = vunpack.c.l.b16 %v1935
    %v1979 = vunpack.c.h.b16 %v1935
    %v1980 = vunpack.c.l.b16 %v1936
    %v1981 = vunpack.c.h.b16 %v1936
    %v1982 = vunpack.c.l.b16 %v1937
    %v1983 = vunpack.c.h.b16 %v1937
    %v1984 = vunpack.c.l.b16 %v1938
    %v1985 = vunpack.c.h.b16 %v1938
    %v1986 = vunpack.c.l.b16 %v1939
    %v1987 = vunpack.c.h.b16 %v1939
    %v1988 = vunpack.c.l.b16 %v1940
    %v1989 = vunpack.c.h.b16 %v1940
    %v1990 = vunpack.c.l.b16 %v1941
    %v1991 = vunpack.c.h.b16 %v1941
    %v1992 = vunpack.c.l.b16 %v1942
    %v1993 = vunpack.c.h.b16 %v1942
    %v1994 = vunpack.c.l.b16 %v1943
    %v1995 = vunpack.c.h.b16 %v1943
    %v1996 = vunpack.c.l.b16 %v1944
    %v1997 = vunpack.c.h.b16 %v1944
    %v1998 = vunpack.c.l.b16 %v1945
    %v1999 = vunpack.c.h.b16 %v1945
    %v2000 = vpack.c.b16 %v1966, %v1964
    %v2001 = vpack.c.b16 %v1967, %v1965
    %v2002 = vpack.c.b16 %v1970, %v1968
    %v2003 = vpack.c.b16 %v1971, %v1969
    %v2004 = vpack.c.b16 %v1974, %v1972
    %v2005 = vpack.c.b16 %v1975, %v1973
    %v2006 = vpack.c.b16 %v1978, %v1976
    %v2007 = vpack.c.b16 %v1979, %v1977
    %v2008 = vpack.c.b16 %v1982, %v1980
    %v2009 = vpack.c.b16 %v1983, %v1981
    %v2010 = vpack.c.b16 %v1986, %v1984
    %v2011 = vpack.c.b16 %v1987, %v1985
    %v2012 = vpack.c.b16 %v1990, %v1988
    %v2013 = vpack.c.b16 %v1991, %v1989
    %v2014 = vpack.c.b16 %v1994, %v1992
    %v2015 = vpack.c.b16 %v1995, %v1993
    %v2016 = vpack.c.b16 %v1998, %v1996
    %v2017 = vpack.c.b16 %v1999, %v1997
    %2036 = vmatpush.bf16.msra.mxu0 %v2014
    %2037 = vmatpush.bf16.msra.mxu0 %v2012
    %2038 = vmatpush.bf16.msra.mxu0 %v2010
    %2039 = vmatpush.bf16.msra.mxu0 %v2008
    %2040 = vmatpush.bf16.msra.mxu0 %v2006
    %2041 = vmatpush.bf16.msra.mxu0 %v2004
    %2042 = vmatpush.bf16.msra.mxu0 %v2002
    %2043 = vmatpush.bf16.msra.mxu0 %v2000
    %2044 = vmatmul.bf16.gmra.mxu0 %v591
    %v2045 = vpop.f32.mrf.mxu0
    %v2046 = vadd.f32 0.0, %v2045
    %v2047 = vpop.f32.mrf.mxu0
    %v2048 = vadd.f32 0.0, %v2047
    %2049 = vmatmul.bf16.gmra.mxu0 %v593
    %v2050 = vpop.f32.mrf.mxu0
    %v2051 = vadd.f32 0.0, %v2050
    %v2052 = vpop.f32.mrf.mxu0
    %v2053 = vadd.f32 0.0, %v2052
    %2054 = vdwg.mxu0
    %2055 = vmatpush.bf16.msra.mxu0 0
    %2056 = vmatpush.bf16.msra.mxu0 0
    %2057 = vmatpush.bf16.msra.mxu0 0
    %2058 = vmatpush.bf16.msra.mxu0 0
    %2059 = vmatpush.bf16.msra.mxu0 0
    %2060 = vmatpush.bf16.msra.mxu0 0
    %2061 = vmatpush.bf16.msra.mxu0 0
    %2062 = vmatpush.bf16.msra.mxu0 %v2016
    %2063 = vmatmul.bf16.gmra.mxu0 %v688
    %v2064 = vpop.f32.mrf.mxu0
    %v2065 = vadd.f32 %v2046, %v2064
    %v2066 = vpop.f32.mrf.mxu0
    %v2067 = vadd.f32 %v2048, %v2066
    %2068 = vmatmul.bf16.gmra.mxu0 %v691
    %v2069 = vpop.f32.mrf.mxu0
    %v2070 = vadd.f32 %v2051, %v2069
    %v2071 = vpop.f32.mrf.mxu0
    %v2072 = vadd.f32 %v2053, %v2071
    %2073 = vdwg.mxu0
    %2074 = vmatpush.bf16.msra.mxu0 %v2015
    %2075 = vmatpush.bf16.msra.mxu0 %v2013
    %2076 = vmatpush.bf16.msra.mxu0 %v2011
    %2077 = vmatpush.bf16.msra.mxu0 %v2009
    %2078 = vmatpush.bf16.msra.mxu0 %v2007
    %2079 = vmatpush.bf16.msra.mxu0 %v2005
    %2080 = vmatpush.bf16.msra.mxu0 %v2003
    %2081 = vmatpush.bf16.msra.mxu0 %v2001
    %2082 = vmatmul.bf16.gmra.mxu0 %v591
    %v2083 = vpop.f32.mrf.mxu0
    %v2084 = vadd.f32 0.0, %v2083
    %v2085 = vpop.f32.mrf.mxu0
    %v2086 = vadd.f32 0.0, %v2085
    %2087 = vmatmul.bf16.gmra.mxu0 %v593
    %v2088 = vpop.f32.mrf.mxu0
    %v2089 = vadd.f32 0.0, %v2088
    %v2090 = vpop.f32.mrf.mxu0
    %v2091 = vadd.f32 0.0, %v2090
    %2092 = vdwg.mxu0
    %2093 = vmatpush.bf16.msra.mxu0 0
    %2094 = vmatpush.bf16.msra.mxu0 0
    %2095 = vmatpush.bf16.msra.mxu0 0
    %2096 = vmatpush.bf16.msra.mxu0 0
    %2097 = vmatpush.bf16.msra.mxu0 0
    %2098 = vmatpush.bf16.msra.mxu0 0
    %2099 = vmatpush.bf16.msra.mxu0 0
    %2100 = vmatpush.bf16.msra.mxu0 %v2017
    %2101 = vmatmul.bf16.gmra.mxu0 %v688
    %v2102 = vpop.f32.mrf.mxu0
    %v2103 = vadd.f32 %v2084, %v2102
    %v2104 = vpop.f32.mrf.mxu0
    %v2105 = vadd.f32 %v2086, %v2104
    %2106 = vmatmul.bf16.gmra.mxu0 %v691
    %v2107 = vpop.f32.mrf.mxu0
    %v2108 = vadd.f32 %v2089, %v2107
    %v2109 = vpop.f32.mrf.mxu0
    %v2110 = vadd.f32 %v2091, %v2109
    %2111 = vdwg.mxu0
    %v2112 = vadd.f32 %v1880, %v2065
    %v2113 = vadd.f32 %v1918, %v2103
    %v2114 = vadd.f32 %v1882, %v2067
    %v2115 = vadd.f32 %v1920, %v2105
    %v2116 = vadd.f32 %v1885, %v2070
    %v2117 = vadd.f32 %v1923, %v2108
    %v2118 = vadd.f32 %v1887, %v2072
    %v2119 = vadd.f32 %v1925, %v2110
    %v2120 = vld [vmem:[%s6] sm:$0x3]
    %v2122 = vperm.slane %v2120, 0
    %v2123 = vperm.slane %v2120, 1
    %v2126 = vadd.f32 %v2112, %v2122
    %v2127 = vadd.f32 %v2113, %v2123
    %v2128 = vadd.f32 %v2114, %v2122
    %v2129 = vadd.f32 %v2115, %v2123
    %v2130 = vadd.f32 %v2116, %v2122
    %v2131 = vadd.f32 %v2117, %v2123
    %v2132 = vadd.f32 %v2118, %v2122
    %v2133 = vadd.f32 %v2119, %v2123
    %v2134 = vmax.f32 %v2126, 0.0
    %v2135 = vmax.f32 %v2127, 0.0
    %v2136 = vmax.f32 %v2128, 0.0
    %v2137 = vmax.f32 %v2129, 0.0
    %v2138 = vmax.f32 %v2130, 0.0
    %v2139 = vmax.f32 %v2131, 0.0
    %v2140 = vmax.f32 %v2132, 0.0
    %v2141 = vmax.f32 %v2133, 0.0
    %v2142 = vadd.f32 %v1550, %v2134
    %v2143 = vadd.f32 %v1551, %v2135
    %v2144 = vadd.f32 %v1552, %v2136
    %v2145 = vadd.f32 %v1553, %v2137
    %v2146 = vadd.f32 %v1554, %v2138
    %v2147 = vadd.f32 %v1555, %v2139
    %v2148 = vadd.f32 %v1556, %v2140
    %v2149 = vadd.f32 %v1557, %v2141
    %v2150 = vmul.f32 %v2142, 0.5
    %v2151 = vmul.f32 %v2143, 0.5
    %v2152 = vmul.f32 %v2144, 0.5
    %v2153 = vmul.f32 %v2145, 0.5
    %v2154 = vmul.f32 %v2146, 0.5
    %v2155 = vmul.f32 %v2147, 0.5
    %v2156 = vmul.f32 %v2148, 0.5
    %v2157 = vmul.f32 %v2149, 0.5
    %v2166 = vrot.slane %v2150, 7
    %v2167 = vrot.slane %v2151, 7
    %v2168 = vrot.slane %v2152, 7
    %v2169 = vsel %vm807, %v2166, %v2168
    %v2170 = vrot.slane %v2153, 7
    %v2171 = vsel %vm807, %v2167, %v2170
    %v2172 = vrot.slane %v2154, 7
    %v2173 = vrot.slane %v2155, 7
    %v2174 = vrot.slane %v2156, 7
    %v2175 = vsel %vm807, %v2172, %v2174
    %v2176 = vrot.slane %v2157, 7
    %v2177 = vsel %vm807, %v2173, %v2176
    %v2190 = vsel %vm807, 0.0, %v2166
    %v2191 = vsel %vm807, 0.0, %v2167
    %v2192 = vsel %vm807, 0.0, %v2172
    %v2193 = vsel %vm807, 0.0, %v2173
    %v2194 = vsel %vm807, %v2168, 0.0
    %v2195 = vsel %vm807, %v2170, 0.0
    %v2196 = vsel %vm807, %v2174, 0.0
    %v2197 = vsel %vm807, %v2176, 0.0
    %v2198 = vpack.c.bf16 %v2191, %v2190
    %v2199 = vpack.c.bf16 %v2171, %v2169
    %v2200 = vpack.c.bf16 %v2195, %v2194
    %v2201 = vpack.c.bf16 %v2193, %v2192
    %v2202 = vpack.c.bf16 %v2177, %v2175
    %v2203 = vpack.c.bf16 %v2197, %v2196
    %vm2204 = vcmask 1043456
    %vm2205 = vcmask 130052
    %vm2206 = vmor %vm2205, %vm2204
    %2207 = vst.msk [vmem:[%s7] sm:$0xff] %vm2206, %v2198
    %2208 = vst.msk [vmem:[%s7 + $0x8] sm:$0xff] %vm2206, %v2199
    %vm2209 = vcmask 126980
    %vm2210 = vmor %vm2209, %vm807
    %2211 = vst.msk [vmem:[%s7 + $0x10] sm:$0x11] %vm2210, %v2200
    %2212 = vst.msk [vmem:[%s7 + $0x18] sm:$0xff] %vm2206, %v2201
    %2213 = vst.msk [vmem:[%s7 + $0x20] sm:$0xff] %vm2206, %v2202
    %2214 = vst.msk [vmem:[%s7 + $0x28] sm:$0x11] %vm2210, %v2203
    // Predicated region
    $region42: #{tpu_custom_call.1} parent=1 // pred_check
      _
    $region43: #{tpu_custom_call.1} parent=1 // pred_check_branch
      %2216 = sbr.rel (0) target = $region45
    $region44: #{tpu_custom_call.1} parent=1 // pred_region
      _
    $region45: #{tpu_custom_call.1} parent=1 // pred_fallthru
      _
    // Predicated region
    $region46: #{tpu_custom_call.1} parent=1 // pred_check
      _
    $region47: #{tpu_custom_call.1} parent=1 // pred_check_branch
      %2218 = sbr.rel (0) target = $region49
    $region48: #{tpu_custom_call.1} parent=1 // pred_region
      _
    $region49: #{tpu_custom_call.1} parent=1 // pred_fallthru
      _
    %2219 = vsyncpa [#allocation3], 1
    %2220 = vsyncpa [#allocation5], 1

</llo_original>
